<compile_context>
chip_gen: v6e
topology: v6e:2x2x1
jax: 0.10.0
libtpu: 0.0.40
codegen_flags: <defaults>
</compile_context>

<pallas_src>
import functools

import jax
import jax.numpy as jnp
from jax.experimental import pallas as pl
from jax.experimental.pallas import tpu as pltpu


# ----------------------------------------------------------------------------
# Pallas kernel: one LSTM cell + residual over a whole time chunk.
# ----------------------------------------------------------------------------
def _lstm_residual_kernel(V, x_ref, wih_ref, whh_ref, b_ref, h0_ref, c0_ref,
                          out_ref, hn_ref, cn_ref, h_scr, c_scr, gx_scr):
    Tc, B, _ = x_ref.shape
    chunk = pl.program_id(0)

    @pl.when(chunk == 0)
    def _():
        h_scr[...] = h0_ref[...].astype(jnp.float32)
        c_scr[...] = c0_ref[...].astype(jnp.float32)

    cdt = wih_ref.dtype  # matmul compute dtype (f32 or bf16); accumulation is f32

    # ---- hoisted input projection: ONE big matmul per time chunk -------------
    # (Tc*B, V) @ (V, 4V) -> (Tc*B, 4V), full-row MXU utilization, f32 accumulate.
    x_flat = x_ref[...].astype(cdt).reshape(Tc * B, V)
    gx = jnp.dot(x_flat, wih_ref[...], preferred_element_type=jnp.float32)
    gx_scr[...] = (gx + b_ref[...].astype(jnp.float32)).reshape(Tc, B, 4 * V)

    whh = whh_ref[...]

    # ---- serial recurrence: only h @ W_hh^T + gate math per step -------------
    def step(t, carry):
        h, c = carry
        gates = gx_scr[t] + jnp.dot(h.astype(cdt), whh,
                                    preferred_element_type=jnp.float32)
        i_g = jax.nn.sigmoid(gates[:, 0 * V:1 * V])
        f_g = jax.nn.sigmoid(gates[:, 1 * V:2 * V])
        g_g = jnp.tanh(gates[:, 2 * V:3 * V])
        o_g = jax.nn.sigmoid(gates[:, 3 * V:4 * V])
        c_new = f_g * c + i_g * g_g
        h_new = o_g * jnp.tanh(c_new)
        # residual connection: x = x + rnn_out (kept f32 on the VPU path)
        out_ref[t] = (x_ref[t].astype(jnp.float32) + h_new).astype(out_ref.dtype)
        return h_new, c_new

    h_fin, c_fin = jax.lax.fori_loop(0, Tc, step,
                                     (h_scr[...], c_scr[...]),
                                     unroll=(Tc <= 16))

    # carry h/c to the next time chunk
    h_scr[...] = h_fin
    c_scr[...] = c_fin

    @pl.when(chunk == pl.num_programs(0) - 1)
    def _():
        hn_ref[...] = h_fin.astype(hn_ref.dtype)
        cn_ref[...] = c_fin.astype(cn_ref.dtype)


def _vmem_limit_bytes(Tc, B, V, act_bytes, w_bytes):
    """Explicit VMEM budget: double-buffered blocks + scratch, 2x margin."""
    blocks = (2 * Tc * B * V * act_bytes          # x chunk (in)
              + 2 * 2 * V * 4 * V * w_bytes       # W_ih^T, W_hh^T
              + 2 * 4 * V * 4                     # bias (f32)
              + 2 * 2 * B * V * act_bytes         # h0, c0
              + 2 * Tc * B * V * act_bytes        # residual out
              + 2 * 2 * B * V * act_bytes)        # hn, cn
    scratch = (2 * B * V + Tc * B * 4 * V) * 4    # h/c/gates scratch (f32)
    need = 2 * (blocks + scratch)
    # never go below the default scoped limit; cap at v7x physical 64 MiB
    return int(min(max(need, 32 * 1024 * 1024), 64 * 1024 * 1024))


def lstm_residual_cell(x_tm, wih_t, whh_t, bias, h0, c0, *, time_chunk=None):
    """x_tm: (T, B, V) time-major. Returns (out_tm (T,B,V), hn (B,V), cn (B,V)).

    wih_t/whh_t: transposed weights (V, 4V), may be bf16 for MXU efficiency.
    bias: (1, 4V) f32 (bias_ih + bias_hh).
    """
    T, B, V = x_tm.shape
    if time_chunk is None:
        time_chunk = T
    assert T % time_chunk == 0, "T must be divisible by time_chunk"
    n_chunks = T // time_chunk

    kernel = functools.partial(_lstm_residual_kernel, V)
    vmem_limit = _vmem_limit_bytes(time_chunk, B, V,
                                   jnp.dtype(x_tm.dtype).itemsize,
                                   jnp.dtype(wih_t.dtype).itemsize)

    out, hn, cn = pl.pallas_call(
        kernel,
        out_shape=(jax.ShapeDtypeStruct((T, B, V), x_tm.dtype),
                   jax.ShapeDtypeStruct((B, V), x_tm.dtype),
                   jax.ShapeDtypeStruct((B, V), x_tm.dtype)),
        grid_spec=pltpu.PrefetchScalarGridSpec(
            num_scalar_prefetch=0,
            grid=(n_chunks,),
            in_specs=[
                pl.BlockSpec((time_chunk, B, V), lambda c: (c, 0, 0)),   # x chunk
                pl.BlockSpec((V, 4 * V), lambda c: (0, 0)),              # W_ih^T
                pl.BlockSpec((V, 4 * V), lambda c: (0, 0)),              # W_hh^T
                pl.BlockSpec((1, 4 * V), lambda c: (0, 0)),              # bias
                pl.BlockSpec((B, V), lambda c: (0, 0)),                  # h0
                pl.BlockSpec((B, V), lambda c: (0, 0)),                  # c0
            ],
            out_specs=[
                pl.BlockSpec((time_chunk, B, V), lambda c: (c, 0, 0)),   # residual out
                pl.BlockSpec((B, V), lambda c: (0, 0)),                  # hn
                pl.BlockSpec((B, V), lambda c: (0, 0)),                  # cn
            ],
            scratch_shapes=[pltpu.VMEM((B, V), jnp.float32),             # h carry
                            pltpu.VMEM((B, V), jnp.float32),             # c carry
                            pltpu.VMEM((time_chunk, B, 4 * V), jnp.float32)],  # gates_x
        ),
        compiler_params=pltpu.CompilerParams(
            dimension_semantics=("arbitrary",),
            vmem_limit_bytes=vmem_limit),
    )(x_tm, wih_t, whh_t, bias, h0, c0)
    return out, hn, cn


# ----------------------------------------------------------------------------
# Parameter construction (deterministic, PyTorch-like uniform init).
# ----------------------------------------------------------------------------
def init_residual_network(key, vector_size, num_cells=2, num_layers=1):
    assert num_layers == 1  # TODO(synk): num_layers>1 not implemented
    k = 1.0 / jnp.sqrt(jnp.float32(vector_size))
    cells = []
    for _ in range(num_cells):
        key, k1, k2, k3, k4 = jax.random.split(key, 5)
        cells.append({
            "weight_ih": jax.random.uniform(k1, (4 * vector_size, vector_size),
                                            jnp.float32, -k, k),
            "weight_hh": jax.random.uniform(k2, (4 * vector_size, vector_size),
                                            jnp.float32, -k, k),
            "bias_ih": jax.random.uniform(k3, (4 * vector_size,),
                                          jnp.float32, -k, k),
            "bias_hh": jax.random.uniform(k4, (4 * vector_size,),
                                          jnp.float32, -k, k),
        })
    return {"vector_size": vector_size, "cells": cells}


# ----------------------------------------------------------------------------
# Forward pass matching ResidualNetwork.forward semantics.
# ----------------------------------------------------------------------------
def residual_network_forward(params, x, hiddens=None, *,
                             compute_dtype=jnp.float32, time_chunk=None):
    input_shape = x.shape
    V = params["vector_size"]
    B, T = input_shape[0], input_shape[1]
    x3 = x.reshape(B, T, V)                      # (B, T, V) batch_first
    num_cells = len(params["cells"])
    if hiddens is None:
        hiddens = [None for _ in range(num_cells)]

    x_tm = jnp.transpose(x3, (1, 0, 2))          # (T, B, V) time-major
    new_hiddens = []
    for i, cell in enumerate(params["cells"]):
        if hiddens[i] is None:
            h0 = jnp.zeros((B, V), x.dtype)
            c0 = jnp.zeros((B, V), x.dtype)
        else:
            h0, c0 = hiddens[i]
            h0, c0 = h0[0], c0[0]                # num_layers == 1
        wih_t = jnp.transpose(cell["weight_ih"]).astype(compute_dtype)   # (V, 4V)
        whh_t = jnp.transpose(cell["weight_hh"]).astype(compute_dtype)   # (V, 4V)
        bias = (cell["bias_ih"] + cell["bias_hh"]).reshape(1, 4 * V).astype(jnp.float32)
        x_tm, hn, cn = lstm_residual_cell(x_tm, wih_t, whh_t, bias, h0, c0,
                                          time_chunk=time_chunk)
        new_hiddens.append((hn[None], cn[None]))  # (num_layers=1, B, V)

    x_out = jnp.transpose(x_tm, (1, 0, 2)).reshape(input_shape)
    return x_out, new_hiddens


# ----------------------------------------------------------------------------
# Pure-JAX reference for numerical validation.
# ----------------------------------------------------------------------------
def _residual_network_ref(params, x):
    input_shape = x.shape
    V = params["vector_size"]
    B, T = input_shape[0], input_shape[1]
    x3 = x.reshape(B, T, V)
    for cell in params["cells"]:
        wih, whh = cell["weight_ih"], cell["weight_hh"]
        b = cell["bias_ih"] + cell["bias_hh"]

        def step(carry, xt):
            h, c = carry
            gates = xt @ wih.T + h @ whh.T + b
            i = jax.nn.sigmoid(gates[:, :V])
            f = jax.nn.sigmoid(gates[:, V:2 * V])
            g = jnp.tanh(gates[:, 2 * V:3 * V])
            o = jax.nn.sigmoid(gates[:, 3 * V:])
            c = f * c + i * g
            h = o * jnp.tanh(c)
            return (h, c), h

        (_, _), ys = jax.lax.scan(step,
                                  (jnp.zeros((B, V)), jnp.zeros((B, V))),
                                  jnp.transpose(x3, (1, 0, 2)))
        x3 = x3 + jnp.transpose(ys, (1, 0, 2))
    return x3.reshape(input_shape)


if __name__ == "__main__":
    key = jax.random.PRNGKey(0)
    key_p, key_x = jax.random.split(key)

    # Input like FramePredictor would pass: (batch, seq, C, H) with C*H == vector_size
    B, T, C, H = 2, 8, 4, 8
    vector_size = C * H  # 32

    params = init_residual_network(key_p, vector_size, num_cells=2, num_layers=1)
    x = jax.random.normal(key_x, (B, T, C, H), dtype=jnp.float32)

    ref = _residual_network_ref(params, x)

    # f32 matmul path: exact match with the f32 reference.
    out, hiddens = residual_network_forward(params, x, hiddens=None)
    out = jax.block_until_ready(out)
    assert out.shape == x.shape
    assert len(hiddens) == 2 and hiddens[0][0].shape == (1, B, vector_size)
    assert jnp.allclose(out, ref, atol=1e-5, rtol=1e-5)

    # bf16 MXU-operand path (f32 accumulate + f32 elementwise): loose tolerance.
    out_bf16, _ = residual_network_forward(params, x, hiddens=None,
                                           compute_dtype=jnp.bfloat16)
    out_bf16 = jax.block_until_ready(out_bf16)
    assert float(jnp.max(jnp.abs(out_bf16 - ref))) < 0.2

    print("KERNEL_OK")
</pallas_src>

<mosaic_0001>
module attributes {stable_mosaic.version = 11 : i64} {
  func.func @_lstm_residual_kernel(%arg0: i32, %arg1: memref<8x2x32xf32, #tpu.memory_space<vmem>>, %arg2: memref<32x128xf32, #tpu.memory_space<vmem>>, %arg3: memref<32x128xf32, #tpu.memory_space<vmem>>, %arg4: memref<1x128xf32, #tpu.memory_space<vmem>>, %arg5: memref<2x32xf32, #tpu.memory_space<vmem>>, %arg6: memref<2x32xf32, #tpu.memory_space<vmem>>, %arg7: memref<8x2x32xf32, #tpu.memory_space<vmem>>, %arg8: memref<2x32xf32, #tpu.memory_space<vmem>>, %arg9: memref<2x32xf32, #tpu.memory_space<vmem>>, %arg10: memref<2x32xf32, #tpu.memory_space<vmem>>, %arg11: memref<2x32xf32, #tpu.memory_space<vmem>>, %arg12: memref<8x2x128xf32, #tpu.memory_space<vmem>>) attributes {dimension_semantics = [#tpu.dimension_semantics<arbitrary>], iteration_bounds = array<i64: 1>, scalar_prefetch = 0 : i64, scratch_operands = 3 : i64, tpu.core_type = #tpu.core_type<tc>, window_params = [{transform_indices = @transform_0, window_bounds = array<i64: 8, 2, 32>}, {pipeline_mode = #tpu.pipeline_mode<synchronous>, transform_indices = @transform_1, window_bounds = array<i64: 32, 128>}, {pipeline_mode = #tpu.pipeline_mode<synchronous>, transform_indices = @transform_2, window_bounds = array<i64: 32, 128>}, {pipeline_mode = #tpu.pipeline_mode<synchronous>, transform_indices = @transform_3, window_bounds = array<i64: 1, 128>}, {pipeline_mode = #tpu.pipeline_mode<synchronous>, transform_indices = @transform_4, window_bounds = array<i64: 2, 32>}, {pipeline_mode = #tpu.pipeline_mode<synchronous>, transform_indices = @transform_5, window_bounds = array<i64: 2, 32>}, {transform_indices = @transform_6, window_bounds = array<i64: 8, 2, 32>}, {pipeline_mode = #tpu.pipeline_mode<synchronous>, transform_indices = @transform_7, window_bounds = array<i64: 2, 32>}, {pipeline_mode = #tpu.pipeline_mode<synchronous>, transform_indices = @transform_8, window_bounds = array<i64: 2, 32>}]} {
    %c0_i32 = arith.constant 0 : i32
    %0 = arith.cmpi eq, %arg0, %c0_i32 : i32
    %1 = arith.extui %0 : i1 to i32
    %c0_i32_0 = arith.constant 0 : i32
    %2 = arith.cmpi ne, %1, %c0_i32_0 : i32
    scf.if %2 {
      %c0_103 = arith.constant 0 : index
      %c0_104 = arith.constant 0 : index
      %324 = vector.load %arg5[%c0_103, %c0_104] : memref<2x32xf32, #tpu.memory_space<vmem>>, vector<2x32xf32>
      %c0_105 = arith.constant 0 : index
      %c0_106 = arith.constant 0 : index
      %325 = vector.load %arg10[%c0_105, %c0_106] : memref<2x32xf32, #tpu.memory_space<vmem>>, vector<2x32xf32>
      tpu.vector_store %arg10[%c0_105, %c0_106], %324 {strides = array<i32>} : memref<2x32xf32, #tpu.memory_space<vmem>>, vector<2x32xf32>,
      %c0_107 = arith.constant 0 : index
      %c0_108 = arith.constant 0 : index
      %326 = vector.load %arg6[%c0_107, %c0_108] : memref<2x32xf32, #tpu.memory_space<vmem>>, vector<2x32xf32>
      %c0_109 = arith.constant 0 : index
      %c0_110 = arith.constant 0 : index
      %327 = vector.load %arg11[%c0_109, %c0_110] : memref<2x32xf32, #tpu.memory_space<vmem>>, vector<2x32xf32>
      tpu.vector_store %arg11[%c0_109, %c0_110], %326 {strides = array<i32>} : memref<2x32xf32, #tpu.memory_space<vmem>>, vector<2x32xf32>,
    } else {
    }
    %c0 = arith.constant 0 : index
    %c0_1 = arith.constant 0 : index
    %c0_2 = arith.constant 0 : index
    %3 = vector.load %arg1[%c0, %c0_1, %c0_2] : memref<8x2x32xf32, #tpu.memory_space<vmem>>, vector<8x2x32xf32>
    %4 = vector.shape_cast %3 : vector<8x2x32xf32> to vector<16x32xf32>
    %c0_3 = arith.constant 0 : index
    %c0_4 = arith.constant 0 : index
    %5 = vector.load %arg2[%c0_3, %c0_4] : memref<32x128xf32, #tpu.memory_space<vmem>>, vector<32x128xf32>
    %cst = arith.constant dense<0.000000e+00> : vector<16x128xf32>
    %6 = tpu.matmul %4, %5, %cst {dimension_numbers = #tpu.dot_dimension_numbers<[1], [0], [0], [1], [0, 0, 1, 1], [], []>} : vector<16x32xf32>, vector<32x128xf32>, vector<16x128xf32> -> vector<16x128xf32>
    %c0_5 = arith.constant 0 : index
    %c0_6 = arith.constant 0 : index
    %7 = vector.load %arg4[%c0_5, %c0_6] : memref<1x128xf32, #tpu.memory_space<vmem>>, vector<1x128xf32>
    %8 = vector.broadcast %7 : vector<1x128xf32> to vector<16x128xf32>
    %9 = arith.addf %6, %8 : vector<16x128xf32>
    %10 = vector.shape_cast %9 : vector<16x128xf32> to vector<8x2x128xf32>
    %c0_7 = arith.constant 0 : index
    %c0_8 = arith.constant 0 : index
    %c0_9 = arith.constant 0 : index
    %11 = vector.load %arg12[%c0_7, %c0_8, %c0_9] : memref<8x2x128xf32, #tpu.memory_space<vmem>>, vector<8x2x128xf32>
    tpu.vector_store %arg12[%c0_7, %c0_8, %c0_9], %10 {strides = array<i32>} : memref<8x2x128xf32, #tpu.memory_space<vmem>>, vector<8x2x128xf32>,
    %c0_10 = arith.constant 0 : index
    %c0_11 = arith.constant 0 : index
    %12 = vector.load %arg3[%c0_10, %c0_11] : memref<32x128xf32, #tpu.memory_space<vmem>>, vector<32x128xf32>
    %c0_12 = arith.constant 0 : index
    %c0_13 = arith.constant 0 : index
    %13 = vector.load %arg10[%c0_12, %c0_13] : memref<2x32xf32, #tpu.memory_space<vmem>>, vector<2x32xf32>
    %c0_14 = arith.constant 0 : index
    %c0_15 = arith.constant 0 : index
    %14 = vector.load %arg11[%c0_14, %c0_15] : memref<2x32xf32, #tpu.memory_space<vmem>>, vector<2x32xf32>
    %c0_i32_16 = arith.constant 0 : i32
    %15 = arith.index_cast %c0_i32_16 : i32 to index
    %c0_17 = arith.constant 0 : index
    %c0_18 = arith.constant 0 : index
    %16 = vector.load %arg12[%15, %c0_17, %c0_18] : memref<8x2x128xf32, #tpu.memory_space<vmem>>, vector<1x2x128xf32>
    %17 = vector.shape_cast %16 : vector<1x2x128xf32> to vector<2x128xf32>
    %cst_19 = arith.constant dense<0.000000e+00> : vector<2x128xf32>
    %18 = tpu.matmul %13, %12, %cst_19 {dimension_numbers = #tpu.dot_dimension_numbers<[1], [0], [0], [1], [0, 0, 1, 1], [], []>} : vector<2x32xf32>, vector<32x128xf32>, vector<2x128xf32> -> vector<2x128xf32>
    %19 = arith.addf %17, %18 : vector<2x128xf32>
    %20 = vector.extract_strided_slice %19 {offsets = [0, 0], sizes = [2, 32], strides = [1, 1]} : vector<2x128xf32> to vector<2x32xf32>
    %21 = arith.negf %20 : vector<2x32xf32>
    %22 = math.exp %21 : vector<2x32xf32>
    %cst_20 = arith.constant 1.000000e+00 : f32
    %23 = vector.broadcast %cst_20 : f32 to vector<2x32xf32>
    %24 = arith.addf %23, %22 : vector<2x32xf32>
    %25 = arith.divf %23, %24 : vector<2x32xf32>
    %26 = vector.extract_strided_slice %19 {offsets = [0, 32], sizes = [2, 32], strides = [1, 1]} : vector<2x128xf32> to vector<2x32xf32>
    %27 = arith.negf %26 : vector<2x32xf32>
    %28 = math.exp %27 : vector<2x32xf32>
    %cst_21 = arith.constant 1.000000e+00 : f32
    %29 = vector.broadcast %cst_21 : f32 to vector<2x32xf32>
    %30 = arith.addf %29, %28 : vector<2x32xf32>
    %31 = arith.divf %29, %30 : vector<2x32xf32>
    %32 = vector.extract_strided_slice %19 {offsets = [0, 64], sizes = [2, 32], strides = [1, 1]} : vector<2x128xf32> to vector<2x32xf32>
    %33 = math.tanh %32 : vector<2x32xf32>
    %34 = vector.extract_strided_slice %19 {offsets = [0, 96], sizes = [2, 32], strides = [1, 1]} : vector<2x128xf32> to vector<2x32xf32>
    %35 = arith.negf %34 : vector<2x32xf32>
    %36 = math.exp %35 : vector<2x32xf32>
    %cst_22 = arith.constant 1.000000e+00 : f32
    %37 = vector.broadcast %cst_22 : f32 to vector<2x32xf32>
    %38 = arith.addf %37, %36 : vector<2x32xf32>
    %39 = arith.divf %37, %38 : vector<2x32xf32>
    %40 = arith.mulf %31, %14 : vector<2x32xf32>
    %41 = arith.mulf %25, %33 : vector<2x32xf32>
    %42 = arith.addf %40, %41 : vector<2x32xf32>
    %43 = math.tanh %42 : vector<2x32xf32>
    %44 = arith.mulf %39, %43 : vector<2x32xf32>
    %45 = arith.index_cast %c0_i32_16 : i32 to index
    %c0_23 = arith.constant 0 : index
    %c0_24 = arith.constant 0 : index
    %46 = vector.load %arg1[%45, %c0_23, %c0_24] : memref<8x2x32xf32, #tpu.memory_space<vmem>>, vector<1x2x32xf32>
    %47 = vector.shape_cast %46 : vector<1x2x32xf32> to vector<2x32xf32>
    %48 = arith.addf %47, %44 : vector<2x32xf32>
    %49 = arith.index_cast %c0_i32_16 : i32 to index
    %c0_25 = arith.constant 0 : index
    %c0_26 = arith.constant 0 : index
    %50 = vector.load %arg7[%49, %c0_25, %c0_26] : memref<8x2x32xf32, #tpu.memory_space<vmem>>, vector<1x2x32xf32>
    %51 = vector.shape_cast %50 : vector<1x2x32xf32> to vector<2x32xf32>
    %52 = vector.shape_cast %48 : vector<2x32xf32> to vector<1x2x32xf32>
    tpu.vector_store %arg7[%49, %c0_25, %c0_26], %52 {strides = array<i32>} : memref<8x2x32xf32, #tpu.memory_space<vmem>>, vector<1x2x32xf32>,
    %c1_i32 = arith.constant 1 : i32
    %53 = arith.index_cast %c1_i32 : i32 to index
    %c0_27 = arith.constant 0 : index
    %c0_28 = arith.constant 0 : index
    %54 = vector.load %arg12[%53, %c0_27, %c0_28] : memref<8x2x128xf32, #tpu.memory_space<vmem>>, vector<1x2x128xf32>
    %55 = vector.shape_cast %54 : vector<1x2x128xf32> to vector<2x128xf32>
    %cst_29 = arith.constant dense<0.000000e+00> : vector<2x128xf32>
    %56 = tpu.matmul %44, %12, %cst_29 {dimension_numbers = #tpu.dot_dimension_numbers<[1], [0], [0], [1], [0, 0, 1, 1], [], []>} : vector<2x32xf32>, vector<32x128xf32>, vector<2x128xf32> -> vector<2x128xf32>
    %57 = arith.addf %55, %56 : vector<2x128xf32>
    %58 = vector.extract_strided_slice %57 {offsets = [0, 0], sizes = [2, 32], strides = [1, 1]} : vector<2x128xf32> to vector<2x32xf32>
    %59 = arith.negf %58 : vector<2x32xf32>
    %60 = math.exp %59 : vector<2x32xf32>
    %cst_30 = arith.constant 1.000000e+00 : f32
    %61 = vector.broadcast %cst_30 : f32 to vector<2x32xf32>
    %62 = arith.addf %61, %60 : vector<2x32xf32>
    %63 = arith.divf %61, %62 : vector<2x32xf32>
    %64 = vector.extract_strided_slice %57 {offsets = [0, 32], sizes = [2, 32], strides = [1, 1]} : vector<2x128xf32> to vector<2x32xf32>
    %65 = arith.negf %64 : vector<2x32xf32>
    %66 = math.exp %65 : vector<2x32xf32>
    %cst_31 = arith.constant 1.000000e+00 : f32
    %67 = vector.broadcast %cst_31 : f32 to vector<2x32xf32>
    %68 = arith.addf %67, %66 : vector<2x32xf32>
    %69 = arith.divf %67, %68 : vector<2x32xf32>
    %70 = vector.extract_strided_slice %57 {offsets = [0, 64], sizes = [2, 32], strides = [1, 1]} : vector<2x128xf32> to vector<2x32xf32>
    %71 = math.tanh %70 : vector<2x32xf32>
    %72 = vector.extract_strided_slice %57 {offsets = [0, 96], sizes = [2, 32], strides = [1, 1]} : vector<2x128xf32> to vector<2x32xf32>
    %73 = arith.negf %72 : vector<2x32xf32>
    %74 = math.exp %73 : vector<2x32xf32>
    %cst_32 = arith.constant 1.000000e+00 : f32
    %75 = vector.broadcast %cst_32 : f32 to vector<2x32xf32>
    %76 = arith.addf %75, %74 : vector<2x32xf32>
    %77 = arith.divf %75, %76 : vector<2x32xf32>
    %78 = arith.mulf %69, %42 : vector<2x32xf32>
    %79 = arith.mulf %63, %71 : vector<2x32xf32>
    %80 = arith.addf %78, %79 : vector<2x32xf32>
    %81 = math.tanh %80 : vector<2x32xf32>
    %82 = arith.mulf %77, %81 : vector<2x32xf32>
    %83 = arith.index_cast %c1_i32 : i32 to index
    %c0_33 = arith.constant 0 : index
    %c0_34 = arith.constant 0 : index
    %84 = vector.load %arg1[%83, %c0_33, %c0_34] : memref<8x2x32xf32, #tpu.memory_space<vmem>>, vector<1x2x32xf32>
    %85 = vector.shape_cast %84 : vector<1x2x32xf32> to vector<2x32xf32>
    %86 = arith.addf %85, %82 : vector<2x32xf32>
    %87 = arith.index_cast %c1_i32 : i32 to index
    %c0_35 = arith.constant 0 : index
    %c0_36 = arith.constant 0 : index
    %88 = vector.load %arg7[%87, %c0_35, %c0_36] : memref<8x2x32xf32, #tpu.memory_space<vmem>>, vector<1x2x32xf32>
    %89 = vector.shape_cast %88 : vector<1x2x32xf32> to vector<2x32xf32>
    %90 = vector.shape_cast %86 : vector<2x32xf32> to vector<1x2x32xf32>
    tpu.vector_store %arg7[%87, %c0_35, %c0_36], %90 {strides = array<i32>} : memref<8x2x32xf32, #tpu.memory_space<vmem>>, vector<1x2x32xf32>,
    %c2_i32 = arith.constant 2 : i32
    %91 = arith.index_cast %c2_i32 : i32 to index
    %c0_37 = arith.constant 0 : index
    %c0_38 = arith.constant 0 : index
    %92 = vector.load %arg12[%91, %c0_37, %c0_38] : memref<8x2x128xf32, #tpu.memory_space<vmem>>, vector<1x2x128xf32>
    %93 = vector.shape_cast %92 : vector<1x2x128xf32> to vector<2x128xf32>
    %cst_39 = arith.constant dense<0.000000e+00> : vector<2x128xf32>
    %94 = tpu.matmul %82, %12, %cst_39 {dimension_numbers = #tpu.dot_dimension_numbers<[1], [0], [0], [1], [0, 0, 1, 1], [], []>} : vector<2x32xf32>, vector<32x128xf32>, vector<2x128xf32> -> vector<2x128xf32>
    %95 = arith.addf %93, %94 : vector<2x128xf32>
    %96 = vector.extract_strided_slice %95 {offsets = [0, 0], sizes = [2, 32], strides = [1, 1]} : vector<2x128xf32> to vector<2x32xf32>
    %97 = arith.negf %96 : vector<2x32xf32>
    %98 = math.exp %97 : vector<2x32xf32>
    %cst_40 = arith.constant 1.000000e+00 : f32
    %99 = vector.broadcast %cst_40 : f32 to vector<2x32xf32>
    %100 = arith.addf %99, %98 : vector<2x32xf32>
    %101 = arith.divf %99, %100 : vector<2x32xf32>
    %102 = vector.extract_strided_slice %95 {offsets = [0, 32], sizes = [2, 32], strides = [1, 1]} : vector<2x128xf32> to vector<2x32xf32>
    %103 = arith.negf %102 : vector<2x32xf32>
    %104 = math.exp %103 : vector<2x32xf32>
    %cst_41 = arith.constant 1.000000e+00 : f32
    %105 = vector.broadcast %cst_41 : f32 to vector<2x32xf32>
    %106 = arith.addf %105, %104 : vector<2x32xf32>
    %107 = arith.divf %105, %106 : vector<2x32xf32>
    %108 = vector.extract_strided_slice %95 {offsets = [0, 64], sizes = [2, 32], strides = [1, 1]} : vector<2x128xf32> to vector<2x32xf32>
    %109 = math.tanh %108 : vector<2x32xf32>
    %110 = vector.extract_strided_slice %95 {offsets = [0, 96], sizes = [2, 32], strides = [1, 1]} : vector<2x128xf32> to vector<2x32xf32>
    %111 = arith.negf %110 : vector<2x32xf32>
    %112 = math.exp %111 : vector<2x32xf32>
    %cst_42 = arith.constant 1.000000e+00 : f32
    %113 = vector.broadcast %cst_42 : f32 to vector<2x32xf32>
    %114 = arith.addf %113, %112 : vector<2x32xf32>
    %115 = arith.divf %113, %114 : vector<2x32xf32>
    %116 = arith.mulf %107, %80 : vector<2x32xf32>
    %117 = arith.mulf %101, %109 : vector<2x32xf32>
    %118 = arith.addf %116, %117 : vector<2x32xf32>
    %119 = math.tanh %118 : vector<2x32xf32>
    %120 = arith.mulf %115, %119 : vector<2x32xf32>
    %121 = arith.index_cast %c2_i32 : i32 to index
    %c0_43 = arith.constant 0 : index
    %c0_44 = arith.constant 0 : index
    %122 = vector.load %arg1[%121, %c0_43, %c0_44] : memref<8x2x32xf32, #tpu.memory_space<vmem>>, vector<1x2x32xf32>
    %123 = vector.shape_cast %122 : vector<1x2x32xf32> to vector<2x32xf32>
    %124 = arith.addf %123, %120 : vector<2x32xf32>
    %125 = arith.index_cast %c2_i32 : i32 to index
    %c0_45 = arith.constant 0 : index
    %c0_46 = arith.constant 0 : index
    %126 = vector.load %arg7[%125, %c0_45, %c0_46] : memref<8x2x32xf32, #tpu.memory_space<vmem>>, vector<1x2x32xf32>
    %127 = vector.shape_cast %126 : vector<1x2x32xf32> to vector<2x32xf32>
    %128 = vector.shape_cast %124 : vector<2x32xf32> to vector<1x2x32xf32>
    tpu.vector_store %arg7[%125, %c0_45, %c0_46], %128 {strides = array<i32>} : memref<8x2x32xf32, #tpu.memory_space<vmem>>, vector<1x2x32xf32>,
    %c3_i32 = arith.constant 3 : i32
    %129 = arith.index_cast %c3_i32 : i32 to index
    %c0_47 = arith.constant 0 : index
    %c0_48 = arith.constant 0 : index
    %130 = vector.load %arg12[%129, %c0_47, %c0_48] : memref<8x2x128xf32, #tpu.memory_space<vmem>>, vector<1x2x128xf32>
    %131 = vector.shape_cast %130 : vector<1x2x128xf32> to vector<2x128xf32>
    %cst_49 = arith.constant dense<0.000000e+00> : vector<2x128xf32>
    %132 = tpu.matmul %120, %12, %cst_49 {dimension_numbers = #tpu.dot_dimension_numbers<[1], [0], [0], [1], [0, 0, 1, 1], [], []>} : vector<2x32xf32>, vector<32x128xf32>, vector<2x128xf32> -> vector<2x128xf32>
    %133 = arith.addf %131, %132 : vector<2x128xf32>
    %134 = vector.extract_strided_slice %133 {offsets = [0, 0], sizes = [2, 32], strides = [1, 1]} : vector<2x128xf32> to vector<2x32xf32>
    %135 = arith.negf %134 : vector<2x32xf32>
    %136 = math.exp %135 : vector<2x32xf32>
    %cst_50 = arith.constant 1.000000e+00 : f32
    %137 = vector.broadcast %cst_50 : f32 to vector<2x32xf32>
    %138 = arith.addf %137, %136 : vector<2x32xf32>
    %139 = arith.divf %137, %138 : vector<2x32xf32>
    %140 = vector.extract_strided_slice %133 {offsets = [0, 32], sizes = [2, 32], strides = [1, 1]} : vector<2x128xf32> to vector<2x32xf32>
    %141 = arith.negf %140 : vector<2x32xf32>
    %142 = math.exp %141 : vector<2x32xf32>
    %cst_51 = arith.constant 1.000000e+00 : f32
    %143 = vector.broadcast %cst_51 : f32 to vector<2x32xf32>
    %144 = arith.addf %143, %142 : vector<2x32xf32>
    %145 = arith.divf %143, %144 : vector<2x32xf32>
    %146 = vector.extract_strided_slice %133 {offsets = [0, 64], sizes = [2, 32], strides = [1, 1]} : vector<2x128xf32> to vector<2x32xf32>
    %147 = math.tanh %146 : vector<2x32xf32>
    %148 = vector.extract_strided_slice %133 {offsets = [0, 96], sizes = [2, 32], strides = [1, 1]} : vector<2x128xf32> to vector<2x32xf32>
    %149 = arith.negf %148 : vector<2x32xf32>
    %150 = math.exp %149 : vector<2x32xf32>
    %cst_52 = arith.constant 1.000000e+00 : f32
    %151 = vector.broadcast %cst_52 : f32 to vector<2x32xf32>
    %152 = arith.addf %151, %150 : vector<2x32xf32>
    %153 = arith.divf %151, %152 : vector<2x32xf32>
    %154 = arith.mulf %145, %118 : vector<2x32xf32>
    %155 = arith.mulf %139, %147 : vector<2x32xf32>
    %156 = arith.addf %154, %155 : vector<2x32xf32>
    %157 = math.tanh %156 : vector<2x32xf32>
    %158 = arith.mulf %153, %157 : vector<2x32xf32>
    %159 = arith.index_cast %c3_i32 : i32 to index
    %c0_53 = arith.constant 0 : index
    %c0_54 = arith.constant 0 : index
    %160 = vector.load %arg1[%159, %c0_53, %c0_54] : memref<8x2x32xf32, #tpu.memory_space<vmem>>, vector<1x2x32xf32>
    %161 = vector.shape_cast %160 : vector<1x2x32xf32> to vector<2x32xf32>
    %162 = arith.addf %161, %158 : vector<2x32xf32>
    %163 = arith.index_cast %c3_i32 : i32 to index
    %c0_55 = arith.constant 0 : index
    %c0_56 = arith.constant 0 : index
    %164 = vector.load %arg7[%163, %c0_55, %c0_56] : memref<8x2x32xf32, #tpu.memory_space<vmem>>, vector<1x2x32xf32>
    %165 = vector.shape_cast %164 : vector<1x2x32xf32> to vector<2x32xf32>
    %166 = vector.shape_cast %162 : vector<2x32xf32> to vector<1x2x32xf32>
    tpu.vector_store %arg7[%163, %c0_55, %c0_56], %166 {strides = array<i32>} : memref<8x2x32xf32, #tpu.memory_space<vmem>>, vector<1x2x32xf32>,
    %c4_i32 = arith.constant 4 : i32
    %167 = arith.index_cast %c4_i32 : i32 to index
    %c0_57 = arith.constant 0 : index
    %c0_58 = arith.constant 0 : index
    %168 = vector.load %arg12[%167, %c0_57, %c0_58] : memref<8x2x128xf32, #tpu.memory_space<vmem>>, vector<1x2x128xf32>
    %169 = vector.shape_cast %168 : vector<1x2x128xf32> to vector<2x128xf32>
    %cst_59 = arith.constant dense<0.000000e+00> : vector<2x128xf32>
    %170 = tpu.matmul %158, %12, %cst_59 {dimension_numbers = #tpu.dot_dimension_numbers<[1], [0], [0], [1], [0, 0, 1, 1], [], []>} : vector<2x32xf32>, vector<32x128xf32>, vector<2x128xf32> -> vector<2x128xf32>
    %171 = arith.addf %169, %170 : vector<2x128xf32>
    %172 = vector.extract_strided_slice %171 {offsets = [0, 0], sizes = [2, 32], strides = [1, 1]} : vector<2x128xf32> to vector<2x32xf32>
    %173 = arith.negf %172 : vector<2x32xf32>
    %174 = math.exp %173 : vector<2x32xf32>
    %cst_60 = arith.constant 1.000000e+00 : f32
    %175 = vector.broadcast %cst_60 : f32 to vector<2x32xf32>
    %176 = arith.addf %175, %174 : vector<2x32xf32>
    %177 = arith.divf %175, %176 : vector<2x32xf32>
    %178 = vector.extract_strided_slice %171 {offsets = [0, 32], sizes = [2, 32], strides = [1, 1]} : vector<2x128xf32> to vector<2x32xf32>
    %179 = arith.negf %178 : vector<2x32xf32>
    %180 = math.exp %179 : vector<2x32xf32>
    %cst_61 = arith.constant 1.000000e+00 : f32
    %181 = vector.broadcast %cst_61 : f32 to vector<2x32xf32>
    %182 = arith.addf %181, %180 : vector<2x32xf32>
    %183 = arith.divf %181, %182 : vector<2x32xf32>
    %184 = vector.extract_strided_slice %171 {offsets = [0, 64], sizes = [2, 32], strides = [1, 1]} : vector<2x128xf32> to vector<2x32xf32>
    %185 = math.tanh %184 : vector<2x32xf32>
    %186 = vector.extract_strided_slice %171 {offsets = [0, 96], sizes = [2, 32], strides = [1, 1]} : vector<2x128xf32> to vector<2x32xf32>
    %187 = arith.negf %186 : vector<2x32xf32>
    %188 = math.exp %187 : vector<2x32xf32>
    %cst_62 = arith.constant 1.000000e+00 : f32
    %189 = vector.broadcast %cst_62 : f32 to vector<2x32xf32>
    %190 = arith.addf %189, %188 : vector<2x32xf32>
    %191 = arith.divf %189, %190 : vector<2x32xf32>
    %192 = arith.mulf %183, %156 : vector<2x32xf32>
    %193 = arith.mulf %177, %185 : vector<2x32xf32>
    %194 = arith.addf %192, %193 : vector<2x32xf32>
    %195 = math.tanh %194 : vector<2x32xf32>
    %196 = arith.mulf %191, %195 : vector<2x32xf32>
    %197 = arith.index_cast %c4_i32 : i32 to index
    %c0_63 = arith.constant 0 : index
    %c0_64 = arith.constant 0 : index
    %198 = vector.load %arg1[%197, %c0_63, %c0_64] : memref<8x2x32xf32, #tpu.memory_space<vmem>>, vector<1x2x32xf32>
    %199 = vector.shape_cast %198 : vector<1x2x32xf32> to vector<2x32xf32>
    %200 = arith.addf %199, %196 : vector<2x32xf32>
    %201 = arith.index_cast %c4_i32 : i32 to index
    %c0_65 = arith.constant 0 : index
    %c0_66 = arith.constant 0 : index
    %202 = vector.load %arg7[%201, %c0_65, %c0_66] : memref<8x2x32xf32, #tpu.memory_space<vmem>>, vector<1x2x32xf32>
    %203 = vector.shape_cast %202 : vector<1x2x32xf32> to vector<2x32xf32>
    %204 = vector.shape_cast %200 : vector<2x32xf32> to vector<1x2x32xf32>
    tpu.vector_store %arg7[%201, %c0_65, %c0_66], %204 {strides = array<i32>} : memref<8x2x32xf32, #tpu.memory_space<vmem>>, vector<1x2x32xf32>,
    %c5_i32 = arith.constant 5 : i32
    %205 = arith.index_cast %c5_i32 : i32 to index
    %c0_67 = arith.constant 0 : index
    %c0_68 = arith.constant 0 : index
    %206 = vector.load %arg12[%205, %c0_67, %c0_68] : memref<8x2x128xf32, #tpu.memory_space<vmem>>, vector<1x2x128xf32>
    %207 = vector.shape_cast %206 : vector<1x2x128xf32> to vector<2x128xf32>
    %cst_69 = arith.constant dense<0.000000e+00> : vector<2x128xf32>
    %208 = tpu.matmul %196, %12, %cst_69 {dimension_numbers = #tpu.dot_dimension_numbers<[1], [0], [0], [1], [0, 0, 1, 1], [], []>} : vector<2x32xf32>, vector<32x128xf32>, vector<2x128xf32> -> vector<2x128xf32>
    %209 = arith.addf %207, %208 : vector<2x128xf32>
    %210 = vector.extract_strided_slice %209 {offsets = [0, 0], sizes = [2, 32], strides = [1, 1]} : vector<2x128xf32> to vector<2x32xf32>
    %211 = arith.negf %210 : vector<2x32xf32>
    %212 = math.exp %211 : vector<2x32xf32>
    %cst_70 = arith.constant 1.000000e+00 : f32
    %213 = vector.broadcast %cst_70 : f32 to vector<2x32xf32>
    %214 = arith.addf %213, %212 : vector<2x32xf32>
    %215 = arith.divf %213, %214 : vector<2x32xf32>
    %216 = vector.extract_strided_slice %209 {offsets = [0, 32], sizes = [2, 32], strides = [1, 1]} : vector<2x128xf32> to vector<2x32xf32>
    %217 = arith.negf %216 : vector<2x32xf32>
    %218 = math.exp %217 : vector<2x32xf32>
    %cst_71 = arith.constant 1.000000e+00 : f32
    %219 = vector.broadcast %cst_71 : f32 to vector<2x32xf32>
    %220 = arith.addf %219, %218 : vector<2x32xf32>
    %221 = arith.divf %219, %220 : vector<2x32xf32>
    %222 = vector.extract_strided_slice %209 {offsets = [0, 64], sizes = [2, 32], strides = [1, 1]} : vector<2x128xf32> to vector<2x32xf32>
    %223 = math.tanh %222 : vector<2x32xf32>
    %224 = vector.extract_strided_slice %209 {offsets = [0, 96], sizes = [2, 32], strides = [1, 1]} : vector<2x128xf32> to vector<2x32xf32>
    %225 = arith.negf %224 : vector<2x32xf32>
    %226 = math.exp %225 : vector<2x32xf32>
    %cst_72 = arith.constant 1.000000e+00 : f32
    %227 = vector.broadcast %cst_72 : f32 to vector<2x32xf32>
    %228 = arith.addf %227, %226 : vector<2x32xf32>
    %229 = arith.divf %227, %228 : vector<2x32xf32>
    %230 = arith.mulf %221, %194 : vector<2x32xf32>
    %231 = arith.mulf %215, %223 : vector<2x32xf32>
    %232 = arith.addf %230, %231 : vector<2x32xf32>
    %233 = math.tanh %232 : vector<2x32xf32>
    %234 = arith.mulf %229, %233 : vector<2x32xf32>
    %235 = arith.index_cast %c5_i32 : i32 to index
    %c0_73 = arith.constant 0 : index
    %c0_74 = arith.constant 0 : index
    %236 = vector.load %arg1[%235, %c0_73, %c0_74] : memref<8x2x32xf32, #tpu.memory_space<vmem>>, vector<1x2x32xf32>
    %237 = vector.shape_cast %236 : vector<1x2x32xf32> to vector<2x32xf32>
    %238 = arith.addf %237, %234 : vector<2x32xf32>
    %239 = arith.index_cast %c5_i32 : i32 to index
    %c0_75 = arith.constant 0 : index
    %c0_76 = arith.constant 0 : index
    %240 = vector.load %arg7[%239, %c0_75, %c0_76] : memref<8x2x32xf32, #tpu.memory_space<vmem>>, vector<1x2x32xf32>
    %241 = vector.shape_cast %240 : vector<1x2x32xf32> to vector<2x32xf32>
    %242 = vector.shape_cast %238 : vector<2x32xf32> to vector<1x2x32xf32>
    tpu.vector_store %arg7[%239, %c0_75, %c0_76], %242 {strides = array<i32>} : memref<8x2x32xf32, #tpu.memory_space<vmem>>, vector<1x2x32xf32>,
    %c6_i32 = arith.constant 6 : i32
    %243 = arith.index_cast %c6_i32 : i32 to index
    %c0_77 = arith.constant 0 : index
    %c0_78 = arith.constant 0 : index
    %244 = vector.load %arg12[%243, %c0_77, %c0_78] : memref<8x2x128xf32, #tpu.memory_space<vmem>>, vector<1x2x128xf32>
    %245 = vector.shape_cast %244 : vector<1x2x128xf32> to vector<2x128xf32>
    %cst_79 = arith.constant dense<0.000000e+00> : vector<2x128xf32>
    %246 = tpu.matmul %234, %12, %cst_79 {dimension_numbers = #tpu.dot_dimension_numbers<[1], [0], [0], [1], [0, 0, 1, 1], [], []>} : vector<2x32xf32>, vector<32x128xf32>, vector<2x128xf32> -> vector<2x128xf32>
    %247 = arith.addf %245, %246 : vector<2x128xf32>
    %248 = vector.extract_strided_slice %247 {offsets = [0, 0], sizes = [2, 32], strides = [1, 1]} : vector<2x128xf32> to vector<2x32xf32>
    %249 = arith.negf %248 : vector<2x32xf32>
    %250 = math.exp %249 : vector<2x32xf32>
    %cst_80 = arith.constant 1.000000e+00 : f32
    %251 = vector.broadcast %cst_80 : f32 to vector<2x32xf32>
    %252 = arith.addf %251, %250 : vector<2x32xf32>
    %253 = arith.divf %251, %252 : vector<2x32xf32>
    %254 = vector.extract_strided_slice %247 {offsets = [0, 32], sizes = [2, 32], strides = [1, 1]} : vector<2x128xf32> to vector<2x32xf32>
    %255 = arith.negf %254 : vector<2x32xf32>
    %256 = math.exp %255 : vector<2x32xf32>
    %cst_81 = arith.constant 1.000000e+00 : f32
    %257 = vector.broadcast %cst_81 : f32 to vector<2x32xf32>
    %258 = arith.addf %257, %256 : vector<2x32xf32>
    %259 = arith.divf %257, %258 : vector<2x32xf32>
    %260 = vector.extract_strided_slice %247 {offsets = [0, 64], sizes = [2, 32], strides = [1, 1]} : vector<2x128xf32> to vector<2x32xf32>
    %261 = math.tanh %260 : vector<2x32xf32>
    %262 = vector.extract_strided_slice %247 {offsets = [0, 96], sizes = [2, 32], strides = [1, 1]} : vector<2x128xf32> to vector<2x32xf32>
    %263 = arith.negf %262 : vector<2x32xf32>
    %264 = math.exp %263 : vector<2x32xf32>
    %cst_82 = arith.constant 1.000000e+00 : f32
    %265 = vector.broadcast %cst_82 : f32 to vector<2x32xf32>
    %266 = arith.addf %265, %264 : vector<2x32xf32>
    %267 = arith.divf %265, %266 : vector<2x32xf32>
    %268 = arith.mulf %259, %232 : vector<2x32xf32>
    %269 = arith.mulf %253, %261 : vector<2x32xf32>
    %270 = arith.addf %268, %269 : vector<2x32xf32>
    %271 = math.tanh %270 : vector<2x32xf32>
    %272 = arith.mulf %267, %271 : vector<2x32xf32>
    %273 = arith.index_cast %c6_i32 : i32 to index
    %c0_83 = arith.constant 0 : index
    %c0_84 = arith.constant 0 : index
    %274 = vector.load %arg1[%273, %c0_83, %c0_84] : memref<8x2x32xf32, #tpu.memory_space<vmem>>, vector<1x2x32xf32>
    %275 = vector.shape_cast %274 : vector<1x2x32xf32> to vector<2x32xf32>
    %276 = arith.addf %275, %272 : vector<2x32xf32>
    %277 = arith.index_cast %c6_i32 : i32 to index
    %c0_85 = arith.constant 0 : index
    %c0_86 = arith.constant 0 : index
    %278 = vector.load %arg7[%277, %c0_85, %c0_86] : memref<8x2x32xf32, #tpu.memory_space<vmem>>, vector<1x2x32xf32>
    %279 = vector.shape_cast %278 : vector<1x2x32xf32> to vector<2x32xf32>
    %280 = vector.shape_cast %276 : vector<2x32xf32> to vector<1x2x32xf32>
    tpu.vector_store %arg7[%277, %c0_85, %c0_86], %280 {strides = array<i32>} : memref<8x2x32xf32, #tpu.memory_space<vmem>>, vector<1x2x32xf32>,
    %c7_i32 = arith.constant 7 : i32
    %281 = arith.index_cast %c7_i32 : i32 to index
    %c0_87 = arith.constant 0 : index
    %c0_88 = arith.constant 0 : index
    %282 = vector.load %arg12[%281, %c0_87, %c0_88] : memref<8x2x128xf32, #tpu.memory_space<vmem>>, vector<1x2x128xf32>
    %283 = vector.shape_cast %282 : vector<1x2x128xf32> to vector<2x128xf32>
    %cst_89 = arith.constant dense<0.000000e+00> : vector<2x128xf32>
    %284 = tpu.matmul %272, %12, %cst_89 {dimension_numbers = #tpu.dot_dimension_numbers<[1], [0], [0], [1], [0, 0, 1, 1], [], []>} : vector<2x32xf32>, vector<32x128xf32>, vector<2x128xf32> -> vector<2x128xf32>
    %285 = arith.addf %283, %284 : vector<2x128xf32>
    %286 = vector.extract_strided_slice %285 {offsets = [0, 0], sizes = [2, 32], strides = [1, 1]} : vector<2x128xf32> to vector<2x32xf32>
    %287 = arith.negf %286 : vector<2x32xf32>
    %288 = math.exp %287 : vector<2x32xf32>
    %cst_90 = arith.constant 1.000000e+00 : f32
    %289 = vector.broadcast %cst_90 : f32 to vector<2x32xf32>
    %290 = arith.addf %289, %288 : vector<2x32xf32>
    %291 = arith.divf %289, %290 : vector<2x32xf32>
    %292 = vector.extract_strided_slice %285 {offsets = [0, 32], sizes = [2, 32], strides = [1, 1]} : vector<2x128xf32> to vector<2x32xf32>
    %293 = arith.negf %292 : vector<2x32xf32>
    %294 = math.exp %293 : vector<2x32xf32>
    %cst_91 = arith.constant 1.000000e+00 : f32
    %295 = vector.broadcast %cst_91 : f32 to vector<2x32xf32>
    %296 = arith.addf %295, %294 : vector<2x32xf32>
    %297 = arith.divf %295, %296 : vector<2x32xf32>
    %298 = vector.extract_strided_slice %285 {offsets = [0, 64], sizes = [2, 32], strides = [1, 1]} : vector<2x128xf32> to vector<2x32xf32>
    %299 = math.tanh %298 : vector<2x32xf32>
    %300 = vector.extract_strided_slice %285 {offsets = [0, 96], sizes = [2, 32], strides = [1, 1]} : vector<2x128xf32> to vector<2x32xf32>
    %301 = arith.negf %300 : vector<2x32xf32>
    %302 = math.exp %301 : vector<2x32xf32>
    %cst_92 = arith.constant 1.000000e+00 : f32
    %303 = vector.broadcast %cst_92 : f32 to vector<2x32xf32>
    %304 = arith.addf %303, %302 : vector<2x32xf32>
    %305 = arith.divf %303, %304 : vector<2x32xf32>
    %306 = arith.mulf %297, %270 : vector<2x32xf32>
    %307 = arith.mulf %291, %299 : vector<2x32xf32>
    %308 = arith.addf %306, %307 : vector<2x32xf32>
    %309 = math.tanh %308 : vector<2x32xf32>
    %310 = arith.mulf %305, %309 : vector<2x32xf32>
    %311 = arith.index_cast %c7_i32 : i32 to index
    %c0_93 = arith.constant 0 : index
    %c0_94 = arith.constant 0 : index
    %312 = vector.load %arg1[%311, %c0_93, %c0_94] : memref<8x2x32xf32, #tpu.memory_space<vmem>>, vector<1x2x32xf32>
    %313 = vector.shape_cast %312 : vector<1x2x32xf32> to vector<2x32xf32>
    %314 = arith.addf %313, %310 : vector<2x32xf32>
    %315 = arith.index_cast %c7_i32 : i32 to index
    %c0_95 = arith.constant 0 : index
    %c0_96 = arith.constant 0 : index
    %316 = vector.load %arg7[%315, %c0_95, %c0_96] : memref<8x2x32xf32, #tpu.memory_space<vmem>>, vector<1x2x32xf32>
    %317 = vector.shape_cast %316 : vector<1x2x32xf32> to vector<2x32xf32>
    %318 = vector.shape_cast %314 : vector<2x32xf32> to vector<1x2x32xf32>
    tpu.vector_store %arg7[%315, %c0_95, %c0_96], %318 {strides = array<i32>} : memref<8x2x32xf32, #tpu.memory_space<vmem>>, vector<1x2x32xf32>,
    %c8_i32 = arith.constant 8 : i32
    %c0_97 = arith.constant 0 : index
    %c0_98 = arith.constant 0 : index
    %319 = vector.load %arg10[%c0_97, %c0_98] : memref<2x32xf32, #tpu.memory_space<vmem>>, vector<2x32xf32>
    tpu.vector_store %arg10[%c0_97, %c0_98], %310 {strides = array<i32>} : memref<2x32xf32, #tpu.memory_space<vmem>>, vector<2x32xf32>,
    %c0_99 = arith.constant 0 : index
    %c0_100 = arith.constant 0 : index
    %320 = vector.load %arg11[%c0_99, %c0_100] : memref<2x32xf32, #tpu.memory_space<vmem>>, vector<2x32xf32>
    tpu.vector_store %arg11[%c0_99, %c0_100], %308 {strides = array<i32>} : memref<2x32xf32, #tpu.memory_space<vmem>>, vector<2x32xf32>,
    %c0_i32_101 = arith.constant 0 : i32
    %321 = arith.cmpi eq, %arg0, %c0_i32_101 : i32
    %322 = arith.extui %321 : i1 to i32
    %c0_i32_102 = arith.constant 0 : i32
    %323 = arith.cmpi ne, %322, %c0_i32_102 : i32
    scf.if %323 {
      %c0_103 = arith.constant 0 : index
      %c0_104 = arith.constant 0 : index
      %324 = vector.load %arg8[%c0_103, %c0_104] : memref<2x32xf32, #tpu.memory_space<vmem>>, vector<2x32xf32>
      tpu.vector_store %arg8[%c0_103, %c0_104], %310 {strides = array<i32>} : memref<2x32xf32, #tpu.memory_space<vmem>>, vector<2x32xf32>,
      %c0_105 = arith.constant 0 : index
      %c0_106 = arith.constant 0 : index
      %325 = vector.load %arg9[%c0_105, %c0_106] : memref<2x32xf32, #tpu.memory_space<vmem>>, vector<2x32xf32>
      tpu.vector_store %arg9[%c0_105, %c0_106], %308 {strides = array<i32>} : memref<2x32xf32, #tpu.memory_space<vmem>>, vector<2x32xf32>,
    } else {
    }
    return
  }
  func.func @transform_0(%arg0: i32) -> (i32, i32, i32) {
    %c0_i32 = arith.constant 0 : i32
    %c0_i32_0 = arith.constant 0 : i32
    %c0_i32_1 = arith.constant 0 : i32
    return %arg0, %c0_i32, %c0_i32_0 : i32, i32, i32
  }
  func.func @transform_1(%arg0: i32) -> (i32, i32) {
    %c0_i32 = arith.constant 0 : i32
    %c0_i32_0 = arith.constant 0 : i32
    %c0_i32_1 = arith.constant 0 : i32
    return %c0_i32, %c0_i32_0 : i32, i32
  }
  func.func @transform_2(%arg0: i32) -> (i32, i32) {
    %c0_i32 = arith.constant 0 : i32
    %c0_i32_0 = arith.constant 0 : i32
    %c0_i32_1 = arith.constant 0 : i32
    return %c0_i32, %c0_i32_0 : i32, i32
  }
  func.func @transform_3(%arg0: i32) -> (i32, i32) {
    %c0_i32 = arith.constant 0 : i32
    %c0_i32_0 = arith.constant 0 : i32
    %c0_i32_1 = arith.constant 0 : i32
    return %c0_i32, %c0_i32_0 : i32, i32
  }
  func.func @transform_4(%arg0: i32) -> (i32, i32) {
    %c0_i32 = arith.constant 0 : i32
    %c0_i32_0 = arith.constant 0 : i32
    %c0_i32_1 = arith.constant 0 : i32
    return %c0_i32, %c0_i32_0 : i32, i32
  }
  func.func @transform_5(%arg0: i32) -> (i32, i32) {
    %c0_i32 = arith.constant 0 : i32
    %c0_i32_0 = arith.constant 0 : i32
    %c0_i32_1 = arith.constant 0 : i32
    return %c0_i32, %c0_i32_0 : i32, i32
  }
  func.func @transform_6(%arg0: i32) -> (i32, i32, i32) {
    %c0_i32 = arith.constant 0 : i32
    %c0_i32_0 = arith.constant 0 : i32
    %c0_i32_1 = arith.constant 0 : i32
    return %arg0, %c0_i32, %c0_i32_0 : i32, i32, i32
  }
  func.func @transform_7(%arg0: i32) -> (i32, i32) {
    %c0_i32 = arith.constant 0 : i32
    %c0_i32_0 = arith.constant 0 : i32
    %c0_i32_1 = arith.constant 0 : i32
    return %c0_i32, %c0_i32_0 : i32, i32
  }
  func.func @transform_8(%arg0: i32) -> (i32, i32) {
    %c0_i32 = arith.constant 0 : i32
    %c0_i32_0 = arith.constant 0 : i32
    %c0_i32_1 = arith.constant 0 : i32
    return %c0_i32, %c0_i32_0 : i32, i32
  }
}

</mosaic_0001>

<llo_original>
// kernel: tpu_custom_call.1
$region0: #{tpu_custom_call.1}
  #allocation0 [shape = 'u32[]', space=smem, size = 0x4, offset = 0x4, fixed_abs, tag = 'smem constant byte address 0x4 - core index']
  #allocation1 [shape = 'u32[144,128]{1,0:T(1,128)}', space=vmem, size = 0x12000, scoped, tag = 'internal scratch']
  #allocation2 [shape = 'f32[2,32]{1,0:T(2,128)}', space=vmem, size = 0x400, scoped, tag = 'scratch operand']
  #allocation3 [shape = 'f32[2,32]{1,0:T(2,128)}', space=vmem, size = 0x400, scoped, tag = 'scratch operand']
  #allocation4 [shape = 'f32[8,2,128]{2,1,0:T(2,128)}', space=vmem, size = 0x2000, scoped, tag = 'scratch operand']
  %s0 = inlined_call_operand.hbm [shape: f32[8,2,32], index: 0, kind: input, shape index: {}]
  %s1 = inlined_call_operand.hbm [shape: f32[32,128], index: 1, kind: input, shape index: {}]
  %s2 = inlined_call_operand.hbm [shape: f32[32,128], index: 2, kind: input, shape index: {}]
  %s3 = inlined_call_operand.vmem [shape: f32[1,128], index: 3, kind: input, shape index: {}]
  %s4 = inlined_call_operand.vmem [shape: f32[2,32], index: 4, kind: input, shape index: {}]
  %s5 = inlined_call_operand.vmem [shape: f32[2,32], index: 5, kind: input, shape index: {}]
  %s6 = inlined_call_operand.hbm [shape: f32[8,2,32], index: 6, kind: output, shape index: {0}]
  %s7 = inlined_call_operand.hbm [shape: f32[2,32], index: 7, kind: output, shape index: {1}]
  %s8 = inlined_call_operand.hbm [shape: f32[2,32], index: 8, kind: output, shape index: {2}]
  %9 = xla_tuple %s6, %s7, %s8
  %s10 = sld [smem:[#allocation0]]
  $region70: #{tpu_custom_call.1} parent=0
    _
  %s12 = ssub.s32 1, %s10
  %s13 = scalar_select 0, %s12, %s10
  $region1: #{tpu_custom_call.1} parent=0
    #allocation5 [shape = 'u8[8192]{0}', space=vmem, size = 0x2000, scoped, tag = 'input window, operand 0, single buffered']
    #allocation6 [shape = 's32[1]{0}', space=sflag, size = 0x4, scoped, tag = 'scoped memory for tpu_custom_call.1']
    #allocation7 [shape = 's32[1]{0}', space=sflag, size = 0x4, scoped, tag = 'scoped memory for tpu_custom_call.1']
    #allocation8 [shape = 'u8[16384]{0}', space=vmem, size = 0x4000, scoped, tag = 'input window, operand 1, single buffered']
    #allocation9 [shape = 's32[1]{0}', space=sflag, size = 0x4, scoped, tag = 'scoped memory for tpu_custom_call.1']
    #allocation10 [shape = 'u8[16384]{0}', space=vmem, size = 0x4000, scoped, tag = 'input window, operand 2, single buffered']
    #allocation11 [shape = 'u8[8192]{0}', space=vmem, size = 0x2000, scoped, tag = 'output window, operand 0, single buffered']
    #allocation12 [shape = 'u8[1024]{0}', space=vmem, size = 0x400, scoped, tag = 'output window, operand 1, single buffered']
    #allocation13 [shape = 's32[1]{0}', space=sflag, size = 0x4, scoped, tag = 'scoped memory for tpu_custom_call.1']
    #allocation14 [shape = 'u8[1024]{0}', space=vmem, size = 0x400, scoped, tag = 'output window, operand 2, single buffered']
    %14 = vsyncpa [#allocation6], 0
    %15 = vsyncpa [#allocation9], 0
    %16 = vsyncpa [#allocation7], 0
    %17 = vsyncpa [#allocation13], 0
    // Predicated region
    $region2: #{tpu_custom_call.1} parent=1 // pred_check
      _
    $region3: #{tpu_custom_call.1} parent=1 // pred_check_branch
      %19 = sbr.rel (0) target = $region5
    $region4: #{tpu_custom_call.1} parent=1 // pred_region
      %s21 = ssub.s32 256, 256
      %22 = vsyncadd [#allocation6], %s21
      %s23 = sshll.u32 [#allocation5], 4
      %s24 = int_to_ptr.vmem [resolvable:$true] %s23
      %29 = dma.hbm_to_vmem [thread:$0]  %s0, 256, %s24, [#allocation6], 32, 32, 2
    $region5: #{tpu_custom_call.1} parent=1 // pred_fallthru
      _
    // Predicated region
    $region6: #{tpu_custom_call.1} parent=1 // pred_check
      _
    $region7: #{tpu_custom_call.1} parent=1 // pred_check_branch
      %31 = sbr.rel (0) target = $region9
    $region8: #{tpu_custom_call.1} parent=1 // pred_region
      %s33 = ssub.s32 512, 512
      %34 = vsyncadd [#allocation9], %s33
      %s35 = sshll.u32 [#allocation8], 4
      %s36 = int_to_ptr.vmem [resolvable:$true] %s35
      %41 = dma.hbm_to_vmem [thread:$0]  %s1, 512, %s36, [#allocation9], 128, 128, 8
    $region9: #{tpu_custom_call.1} parent=1 // pred_fallthru
      _
    // Predicated region
    $region10: #{tpu_custom_call.1} parent=1 // pred_check
      _
    $region11: #{tpu_custom_call.1} parent=1 // pred_check_branch
      %43 = sbr.rel (0) target = $region13
    $region12: #{tpu_custom_call.1} parent=1 // pred_region
      %s45 = ssub.s32 512, 512
      %46 = vsyncadd [#allocation9], %s45
      %s47 = sshll.u32 [#allocation10], 4
      %s48 = int_to_ptr.vmem [resolvable:$true] %s47
      %53 = dma.hbm_to_vmem [thread:$0]  %s2, 512, %s48, [#allocation9], 128, 128, 8
    $region13: #{tpu_custom_call.1} parent=1 // pred_fallthru
      _
    // Predicated region
    $region14: #{tpu_custom_call.1} parent=1 // pred_check
      _
    $region15: #{tpu_custom_call.1} parent=1 // pred_check_branch
      %55 = sbr.rel (0) target = $region17
    $region16: #{tpu_custom_call.1} parent=1 // pred_region
      _
    $region17: #{tpu_custom_call.1} parent=1 // pred_fallthru
      _
    // Predicated region
    $region18: #{tpu_custom_call.1} parent=1 // pred_check
      _
    $region19: #{tpu_custom_call.1} parent=1 // pred_check_branch
      %57 = sbr.rel (0) target = $region21
    $region20: #{tpu_custom_call.1} parent=1 // pred_region
      _
    $region21: #{tpu_custom_call.1} parent=1 // pred_fallthru
      _
    // Predicated region
    $region22: #{tpu_custom_call.1} parent=1 // pred_check
      _
    $region23: #{tpu_custom_call.1} parent=1 // pred_check_branch
      %59 = sbr.rel (0) target = $region25
    $region24: #{tpu_custom_call.1} parent=1 // pred_region
      _
    $region25: #{tpu_custom_call.1} parent=1 // pred_fallthru
      _
    // Predicated region
    $region26: #{tpu_custom_call.1} parent=1 // pred_check
      _
    $region27: #{tpu_custom_call.1} parent=1 // pred_check_branch
      %61 = sbr.rel (0) target = $region29
    $region28: #{tpu_custom_call.1} parent=1 // pred_region
      %62 = dma.done [#allocation6], 256
    $region29: #{tpu_custom_call.1} parent=1 // pred_fallthru
      _
    // Predicated region
    $region30: #{tpu_custom_call.1} parent=1 // pred_check
      _
    $region31: #{tpu_custom_call.1} parent=1 // pred_check_branch
      %64 = sbr.rel (0) target = $region33
    $region32: #{tpu_custom_call.1} parent=1 // pred_region
      %65 = dma.done [#allocation9], 512
    $region33: #{tpu_custom_call.1} parent=1 // pred_fallthru
      _
    // Predicated region
    $region34: #{tpu_custom_call.1} parent=1 // pred_check
      _
    $region35: #{tpu_custom_call.1} parent=1 // pred_check_branch
      %67 = sbr.rel (0) target = $region37
    $region36: #{tpu_custom_call.1} parent=1 // pred_region
      %68 = dma.done [#allocation9], 512
    $region37: #{tpu_custom_call.1} parent=1 // pred_fallthru
      _
    %p69 = scmp.eq.s32.totalorder 0, 0
    // Predicated region
    $region38: #{tpu_custom_call.1} parent=1 // pred_check
      %p70 = pneg %p69
    $region39: #{tpu_custom_call.1} parent=1 // pred_check_branch
      %72 = sbr.rel (%p70) target = $region41
    $region40: #{tpu_custom_call.1} parent=1 // pred_region
      %v73 = vld [vmem:[%s4] sm:$0x3]
      %vm74 = vcmask 254976
      %75 = vst.msk [vmem:[#allocation2] sm:$0x3] %vm74, %v73
      %v76 = vld [vmem:[%s5] sm:$0x3]
      %77 = vst.msk [vmem:[#allocation3] sm:$0x3] %vm74, %v76
    $region41: #{tpu_custom_call.1} parent=1 // pred_fallthru
      _
    %v78 = vld [vmem:[#allocation5] sm:$0x3]
    %v79 = vld [vmem:[#allocation5 + $0x2] sm:$0x3]
    %v80 = vld [vmem:[#allocation5 + $0x4] sm:$0x3]
    %v81 = vld [vmem:[#allocation5 + $0x6] sm:$0x3]
    %v82 = vld [vmem:[#allocation5 + $0x8] sm:$0x3]
    %v83 = vld [vmem:[#allocation5 + $0xa] sm:$0x3]
    %v84 = vld [vmem:[#allocation5 + $0xc] sm:$0x3]
    %v85 = vld [vmem:[#allocation5 + $0xe] sm:$0x3]
    %v86 = vld [vmem:[#allocation8] sm:$0xff]
    %v87 = vld [vmem:[#allocation8 + $0x8] sm:$0xff]
    %v88 = vld [vmem:[#allocation8 + $0x10] sm:$0xff]
    %v89 = vld [vmem:[#allocation8 + $0x18] sm:$0xff]
    %v90 = vld [vmem:[%s3] sm:$0x1]
    %v92 = vlaneseq
    %v93 = vshrl.u32 %v92, 7
    %v94 = vsub.s32 0, %v93
    %v95 = vrot.slane %v90, %v94
    %v105 = vcombine.low %v78, %v79
    %v106 = vcombine.low %v80, %v81
    %v108 = vunpack.c.l.s4 1983009808
    %v109 = vunpack.c.0.s8 %v108
    %v110 = vlaneseq
    %v111 = vshrl.u32 %v110, 7
    %v112 = vsub.s32 %v109, %v111
    %v113 = vrot.slane %v105, %v112
    %v115 = vunpack.c.l.s4 1983009808
    %v116 = vunpack.c.0.s8 %v115
    %v117 = vlaneseq
    %v118 = vshrl.u32 %v117, 7
    %v119 = vsub.s32 %v116, %v118
    %v120 = vrot.slane %v106, %v119
    %v121 = vcombine.low %v113, %v120
    %v122 = vcombine.low %v82, %v83
    %v123 = vcombine.low %v84, %v85
    %v125 = vunpack.c.l.s4 1983009808
    %v126 = vunpack.c.0.s8 %v125
    %v127 = vlaneseq
    %v128 = vshrl.u32 %v127, 7
    %v129 = vsub.s32 %v126, %v128
    %v130 = vrot.slane %v122, %v129
    %v132 = vunpack.c.l.s4 1983009808
    %v133 = vunpack.c.0.s8 %v132
    %v134 = vlaneseq
    %v135 = vshrl.u32 %v134, 7
    %v136 = vsub.s32 %v133, %v135
    %v137 = vrot.slane %v123, %v136
    %v138 = vcombine.low %v130, %v137
    %vm139 = vcmask 261120
    %v140 = vsel %vm139, %v121, 0
    %v142 = vsel %vm139, %v138, 0
    %144 = vmatprep.subr.mxu0 0.0
    %145 = vmatpush1.msra.mxu0 0.0
    %146 = vmatprep.subr.mxu0 0.0
    %147 = vmatpush1.msra.mxu0 0.0
    %148 = vmatprep.subr.mxu0 0.0
    %149 = vmatpush1.msra.mxu0 0.0
    %150 = vmatprep.subr.mxu0 0.0
    %151 = vmatpush1.msra.mxu0 0.0
    %152 = vmatprep.subr.mxu0 0.0
    %153 = vmatpush1.msra.mxu0 0.0
    %154 = vmatprep.subr.mxu0 0.0
    %155 = vmatpush1.msra.mxu0 0.0
    %156 = vmatprep.subr.mxu0 0.0
    %157 = vmatpush1.msra.mxu0 0.0
    %158 = vmatprep.subr.mxu0 0.0
    %159 = vmatpush1.msra.mxu0 0.0
    %160 = vmatprep.subr.mxu0 0.0
    %161 = vmatpush1.msra.mxu0 0.0
    %162 = vmatprep.subr.mxu0 0.0
    %163 = vmatpush1.msra.mxu0 0.0
    %164 = vmatprep.subr.mxu0 0.0
    %165 = vmatpush1.msra.mxu0 0.0
    %166 = vmatprep.subr.mxu0 0.0
    %167 = vmatpush1.msra.mxu0 0.0
    %168 = vmatprep.subr.mxu0 0.0
    %169 = vmatpush1.msra.mxu0 %v89
    %170 = vmatprep.subr.mxu0 0.0
    %171 = vmatpush1.msra.mxu0 %v88
    %172 = vmatprep.subr.mxu0 0.0
    %173 = vmatpush1.msra.mxu0 %v87
    %174 = vmatprep.subr.mxu0 0.0
    %175 = vmatpush1.msra.mxu0 %v86
    %176 = vmatprep.subr.mxu0 0.0
    %177 = vmatpush2.msra.mxu0 0.0
    %178 = vmatprep.subr.mxu0 0.0
    %179 = vmatpush2.msra.mxu0 0.0
    %180 = vmatprep.subr.mxu0 0.0
    %181 = vmatpush2.msra.mxu0 0.0
    %182 = vmatprep.subr.mxu0 0.0
    %183 = vmatpush2.msra.mxu0 0.0
    %184 = vmatprep.subr.mxu0 0.0
    %185 = vmatpush2.msra.mxu0 0.0
    %186 = vmatprep.subr.mxu0 0.0
    %187 = vmatpush2.msra.mxu0 0.0
    %188 = vmatprep.subr.mxu0 0.0
    %189 = vmatpush2.msra.mxu0 0.0
    %190 = vmatprep.subr.mxu0 0.0
    %191 = vmatpush2.msra.mxu0 0.0
    %192 = vmatprep.subr.mxu0 0.0
    %193 = vmatpush2.msra.mxu0 0.0
    %194 = vmatprep.subr.mxu0 0.0
    %195 = vmatpush2.msra.mxu0 0.0
    %196 = vmatprep.subr.mxu0 0.0
    %197 = vmatpush2.msra.mxu0 0.0
    %198 = vmatprep.subr.mxu0 0.0
    %199 = vmatpush2.msra.mxu0 0.0
    %200 = vmatprep.subr.mxu0 0.0
    %201 = vmatpush2.msra.mxu0 0.0
    %202 = vmatprep.subr.mxu0 0.0
    %203 = vmatpush2.msra.mxu0 0.0
    %204 = vmatprep.subr.mxu0 0.0
    %205 = vmatpush2.msra.mxu0 0.0
    %206 = vmatprep.subr.mxu0 0.0
    %207 = vmatpush2.msra.mxu0 0.0
    %208 = vmatprep.mubr.f32.mxu0 0.0
    %209 = vmatmul.mubr.f32.gmra.mxu0 %v140
    %v210 = vpop.f32.mrf.mxu0
    %v211 = vadd.f32 %v95, %v210
    %v212 = vpop.f32.mrf.mxu0
    %213 = vmatprep.mubr.f32.mxu0 0.0
    %214 = vmatmul.mubr.f32.gmra.mxu0 %v142
    %v215 = vpop.f32.mrf.mxu0
    %v216 = vadd.f32 %v95, %v215
    %v217 = vpop.f32.mrf.mxu0
    %218 = vdwg.mxu0
    %v221 = vcombine.high %v211, %v211
    %v223 = vunpack.c.l.s4 1983009808
    %v224 = vunpack.c.0.s8 %v223
    %v225 = vlaneseq
    %v226 = vshrl.u32 %v225, 7
    %v227 = vsub.s32 %v224, %v226
    %v228 = vrot.slane %v211, %v227
    %v230 = vunpack.c.l.s4 1983009808
    %v231 = vunpack.c.0.s8 %v230
    %v232 = vlaneseq
    %v233 = vshrl.u32 %v232, 7
    %v234 = vsub.s32 %v231, %v233
    %v235 = vrot.slane %v221, %v234
    %v236 = vcombine.high %v228, %v228
    %v237 = vcombine.high %v235, %v235
    %v238 = vcombine.high %v216, %v216
    %v240 = vunpack.c.l.s4 1983009808
    %v241 = vunpack.c.0.s8 %v240
    %v242 = vlaneseq
    %v243 = vshrl.u32 %v242, 7
    %v244 = vsub.s32 %v241, %v243
    %v245 = vrot.slane %v216, %v244
    %v247 = vunpack.c.l.s4 1983009808
    %v248 = vunpack.c.0.s8 %v247
    %v249 = vlaneseq
    %v250 = vshrl.u32 %v249, 7
    %v251 = vsub.s32 %v248, %v250
    %v252 = vrot.slane %v238, %v251
    %v253 = vcombine.high %v245, %v245
    %v254 = vcombine.high %v252, %v252
    %263 = vst [vmem:[#allocation4] sm:$0x3] %v228
    %264 = vst [vmem:[#allocation4 + $0x2] sm:$0x3] %v236
    %265 = vst [vmem:[#allocation4 + $0x4] sm:$0x3] %v235
    %266 = vst [vmem:[#allocation4 + $0x6] sm:$0x3] %v237
    %267 = vst [vmem:[#allocation4 + $0x8] sm:$0x3] %v245
    %268 = vst [vmem:[#allocation4 + $0xa] sm:$0x3] %v253
    %269 = vst [vmem:[#allocation4 + $0xc] sm:$0x3] %v252
    %270 = vst [vmem:[#allocation4 + $0xe] sm:$0x3] %v254
    %v271 = vld [vmem:[#allocation10] sm:$0xff]
    %v272 = vld [vmem:[#allocation10 + $0x8] sm:$0xff]
    %v273 = vld [vmem:[#allocation10 + $0x10] sm:$0xff]
    %v274 = vld [vmem:[#allocation10 + $0x18] sm:$0xff]
    %v275 = vld [vmem:[#allocation2] sm:$0x3]
    %v276 = vld [vmem:[#allocation3] sm:$0x3]
    %v277 = vld [vmem:[#allocation4] sm:$0x3]
    %v279 = vsel %vm139, %v275, 0
    %281 = vmatprep.subr.mxu0 0.0
    %282 = vmatpush1.msra.mxu0 0.0
    %283 = vmatprep.subr.mxu0 0.0
    %284 = vmatpush1.msra.mxu0 0.0
    %285 = vmatprep.subr.mxu0 0.0
    %286 = vmatpush1.msra.mxu0 0.0
    %287 = vmatprep.subr.mxu0 0.0
    %288 = vmatpush1.msra.mxu0 0.0
    %289 = vmatprep.subr.mxu0 0.0
    %290 = vmatpush1.msra.mxu0 0.0
    %291 = vmatprep.subr.mxu0 0.0
    %292 = vmatpush1.msra.mxu0 0.0
    %293 = vmatprep.subr.mxu0 0.0
    %294 = vmatpush1.msra.mxu0 0.0
    %295 = vmatprep.subr.mxu0 0.0
    %296 = vmatpush1.msra.mxu0 0.0
    %297 = vmatprep.subr.mxu0 0.0
    %298 = vmatpush1.msra.mxu0 0.0
    %299 = vmatprep.subr.mxu0 0.0
    %300 = vmatpush1.msra.mxu0 0.0
    %301 = vmatprep.subr.mxu0 0.0
    %302 = vmatpush1.msra.mxu0 0.0
    %303 = vmatprep.subr.mxu0 0.0
    %304 = vmatpush1.msra.mxu0 0.0
    %305 = vmatprep.subr.mxu0 0.0
    %306 = vmatpush1.msra.mxu0 %v274
    %307 = vmatprep.subr.mxu0 0.0
    %308 = vmatpush1.msra.mxu0 %v273
    %309 = vmatprep.subr.mxu0 0.0
    %310 = vmatpush1.msra.mxu0 %v272
    %311 = vmatprep.subr.mxu0 0.0
    %312 = vmatpush1.msra.mxu0 %v271
    %313 = vmatprep.subr.mxu0 0.0
    %314 = vmatpush2.msra.mxu0 0.0
    %315 = vmatprep.subr.mxu0 0.0
    %316 = vmatpush2.msra.mxu0 0.0
    %317 = vmatprep.subr.mxu0 0.0
    %318 = vmatpush2.msra.mxu0 0.0
    %319 = vmatprep.subr.mxu0 0.0
    %320 = vmatpush2.msra.mxu0 0.0
    %321 = vmatprep.subr.mxu0 0.0
    %322 = vmatpush2.msra.mxu0 0.0
    %323 = vmatprep.subr.mxu0 0.0
    %324 = vmatpush2.msra.mxu0 0.0
    %325 = vmatprep.subr.mxu0 0.0
    %326 = vmatpush2.msra.mxu0 0.0
    %327 = vmatprep.subr.mxu0 0.0
    %328 = vmatpush2.msra.mxu0 0.0
    %329 = vmatprep.subr.mxu0 0.0
    %330 = vmatpush2.msra.mxu0 0.0
    %331 = vmatprep.subr.mxu0 0.0
    %332 = vmatpush2.msra.mxu0 0.0
    %333 = vmatprep.subr.mxu0 0.0
    %334 = vmatpush2.msra.mxu0 0.0
    %335 = vmatprep.subr.mxu0 0.0
    %336 = vmatpush2.msra.mxu0 0.0
    %337 = vmatprep.subr.mxu0 0.0
    %338 = vmatpush2.msra.mxu0 0.0
    %339 = vmatprep.subr.mxu0 0.0
    %340 = vmatpush2.msra.mxu0 0.0
    %341 = vmatprep.subr.mxu0 0.0
    %342 = vmatpush2.msra.mxu0 0.0
    %343 = vmatprep.subr.mxu0 0.0
    %344 = vmatpush2.msra.mxu0 0.0
    %345 = vmatprep.mubr.f32.mxu0 0.0
    %346 = vmatmul.mubr.f32.gmra.mxu0 %v279
    %v347 = vpop.f32.mrf.mxu0
    %v348 = vadd.f32 0.0, %v347
    %v349 = vpop.f32.mrf.mxu0
    %350 = vdwg.mxu0
    %v351 = vadd.f32 %v277, %v348
    %v352 = vxor.u32 %v351, 2147483648
    %v353 = vmul.f32 %v352, 1.442695
    %v354 = vpow.pop %v353
    %v355 = vadd.f32 %v354, 1.0
    %v356 = vrcp.pop %v355
    %v357 = vmul.f32 1.0, %v356
    %v358 = vtanh.pop %v351
    %360 = vrot.lane.b32.xlu0 %v276, 32
    %v361 = vpop.permute.xlu0 %360
    %v363 = vmul.f32 %v357, %v361
    %365 = vrot.lane.b32.xlu0 %v358, 64
    %v366 = vpop.permute.xlu0 %365
    %v368 = vmul.f32 %v357, %v366
    %370 = vrot.lane.b32.xlu0 %v368, 32
    %v371 = vpop.permute.xlu0 %370
    %v373 = vadd.f32 %v363, %v371
    %v374 = vtanh.pop %v373
    %376 = vrot.lane.b32.xlu0 %v374, 64
    %v377 = vpop.permute.xlu0 %376
    %v379 = vmul.f32 %v357, %v377
    %v380 = vld [vmem:[#allocation5] sm:$0x3]
    %382 = vrot.lane.b32.xlu0 %v379, 32
    %v383 = vpop.permute.xlu0 %382
    %v385 = vadd.f32 %v380, %v383
    %vm386 = vcmask 254976
    %387 = vst.msk [vmem:[#allocation11] sm:$0x3] %vm386, %v385
    %s388 = scalar_lea.vmem [#allocation4], 2
    %v389 = vld [vmem:[%s388] sm:$0x3]
    %v390 = vsel %vm139, %v383, 0
    %392 = vmatprep.subr.mxu0 0.0
    %393 = vmatpush1.msra.mxu0 0.0
    %394 = vmatprep.subr.mxu0 0.0
    %395 = vmatpush1.msra.mxu0 0.0
    %396 = vmatprep.subr.mxu0 0.0
    %397 = vmatpush1.msra.mxu0 0.0
    %398 = vmatprep.subr.mxu0 0.0
    %399 = vmatpush1.msra.mxu0 0.0
    %400 = vmatprep.subr.mxu0 0.0
    %401 = vmatpush1.msra.mxu0 0.0
    %402 = vmatprep.subr.mxu0 0.0
    %403 = vmatpush1.msra.mxu0 0.0
    %404 = vmatprep.subr.mxu0 0.0
    %405 = vmatpush1.msra.mxu0 0.0
    %406 = vmatprep.subr.mxu0 0.0
    %407 = vmatpush1.msra.mxu0 0.0
    %408 = vmatprep.subr.mxu0 0.0
    %409 = vmatpush1.msra.mxu0 0.0
    %410 = vmatprep.subr.mxu0 0.0
    %411 = vmatpush1.msra.mxu0 0.0
    %412 = vmatprep.subr.mxu0 0.0
    %413 = vmatpush1.msra.mxu0 0.0
    %414 = vmatprep.subr.mxu0 0.0
    %415 = vmatpush1.msra.mxu0 0.0
    %416 = vmatprep.subr.mxu0 0.0
    %417 = vmatpush1.msra.mxu0 %v274
    %418 = vmatprep.subr.mxu0 0.0
    %419 = vmatpush1.msra.mxu0 %v273
    %420 = vmatprep.subr.mxu0 0.0
    %421 = vmatpush1.msra.mxu0 %v272
    %422 = vmatprep.subr.mxu0 0.0
    %423 = vmatpush1.msra.mxu0 %v271
    %424 = vmatprep.subr.mxu0 0.0
    %425 = vmatpush2.msra.mxu0 0.0
    %426 = vmatprep.subr.mxu0 0.0
    %427 = vmatpush2.msra.mxu0 0.0
    %428 = vmatprep.subr.mxu0 0.0
    %429 = vmatpush2.msra.mxu0 0.0
    %430 = vmatprep.subr.mxu0 0.0
    %431 = vmatpush2.msra.mxu0 0.0
    %432 = vmatprep.subr.mxu0 0.0
    %433 = vmatpush2.msra.mxu0 0.0
    %434 = vmatprep.subr.mxu0 0.0
    %435 = vmatpush2.msra.mxu0 0.0
    %436 = vmatprep.subr.mxu0 0.0
    %437 = vmatpush2.msra.mxu0 0.0
    %438 = vmatprep.subr.mxu0 0.0
    %439 = vmatpush2.msra.mxu0 0.0
    %440 = vmatprep.subr.mxu0 0.0
    %441 = vmatpush2.msra.mxu0 0.0
    %442 = vmatprep.subr.mxu0 0.0
    %443 = vmatpush2.msra.mxu0 0.0
    %444 = vmatprep.subr.mxu0 0.0
    %445 = vmatpush2.msra.mxu0 0.0
    %446 = vmatprep.subr.mxu0 0.0
    %447 = vmatpush2.msra.mxu0 0.0
    %448 = vmatprep.subr.mxu0 0.0
    %449 = vmatpush2.msra.mxu0 0.0
    %450 = vmatprep.subr.mxu0 0.0
    %451 = vmatpush2.msra.mxu0 0.0
    %452 = vmatprep.subr.mxu0 0.0
    %453 = vmatpush2.msra.mxu0 0.0
    %454 = vmatprep.subr.mxu0 0.0
    %455 = vmatpush2.msra.mxu0 0.0
    %456 = vmatprep.mubr.f32.mxu0 0.0
    %457 = vmatmul.mubr.f32.gmra.mxu0 %v390
    %v458 = vpop.f32.mrf.mxu0
    %v459 = vadd.f32 0.0, %v458
    %v460 = vpop.f32.mrf.mxu0
    %461 = vdwg.mxu0
    %v462 = vadd.f32 %v389, %v459
    %v463 = vxor.u32 %v462, 2147483648
    %v464 = vmul.f32 %v463, 1.442695
    %v465 = vpow.pop %v464
    %v466 = vadd.f32 %v465, 1.0
    %v467 = vrcp.pop %v466
    %v468 = vmul.f32 1.0, %v467
    %v469 = vtanh.pop %v462
    %v470 = vmul.f32 %v468, %v373
    %472 = vrot.lane.b32.xlu0 %v469, 64
    %v473 = vpop.permute.xlu0 %472
    %v475 = vmul.f32 %v468, %v473
    %477 = vrot.lane.b32.xlu0 %v475, 32
    %v478 = vpop.permute.xlu0 %477
    %v480 = vadd.f32 %v470, %v478
    %v481 = vtanh.pop %v480
    %483 = vrot.lane.b32.xlu0 %v481, 64
    %v484 = vpop.permute.xlu0 %483
    %v486 = vmul.f32 %v468, %v484
    %s487 = scalar_lea.vmem [#allocation5], 2
    %v488 = vld [vmem:[%s487] sm:$0x3]
    %490 = vrot.lane.b32.xlu0 %v486, 32
    %v491 = vpop.permute.xlu0 %490
    %v493 = vadd.f32 %v488, %v491
    %s494 = scalar_lea.vmem [#allocation11], 2
    %495 = vst.msk [vmem:[%s494] sm:$0x3] %vm386, %v493
    %s496 = scalar_lea.vmem [#allocation4], 4
    %v497 = vld [vmem:[%s496] sm:$0x3]
    %v498 = vsel %vm139, %v491, 0
    %500 = vmatprep.subr.mxu0 0.0
    %501 = vmatpush1.msra.mxu0 0.0
    %502 = vmatprep.subr.mxu0 0.0
    %503 = vmatpush1.msra.mxu0 0.0
    %504 = vmatprep.subr.mxu0 0.0
    %505 = vmatpush1.msra.mxu0 0.0
    %506 = vmatprep.subr.mxu0 0.0
    %507 = vmatpush1.msra.mxu0 0.0
    %508 = vmatprep.subr.mxu0 0.0
    %509 = vmatpush1.msra.mxu0 0.0
    %510 = vmatprep.subr.mxu0 0.0
    %511 = vmatpush1.msra.mxu0 0.0
    %512 = vmatprep.subr.mxu0 0.0
    %513 = vmatpush1.msra.mxu0 0.0
    %514 = vmatprep.subr.mxu0 0.0
    %515 = vmatpush1.msra.mxu0 0.0
    %516 = vmatprep.subr.mxu0 0.0
    %517 = vmatpush1.msra.mxu0 0.0
    %518 = vmatprep.subr.mxu0 0.0
    %519 = vmatpush1.msra.mxu0 0.0
    %520 = vmatprep.subr.mxu0 0.0
    %521 = vmatpush1.msra.mxu0 0.0
    %522 = vmatprep.subr.mxu0 0.0
    %523 = vmatpush1.msra.mxu0 0.0
    %524 = vmatprep.subr.mxu0 0.0
    %525 = vmatpush1.msra.mxu0 %v274
    %526 = vmatprep.subr.mxu0 0.0
    %527 = vmatpush1.msra.mxu0 %v273
    %528 = vmatprep.subr.mxu0 0.0
    %529 = vmatpush1.msra.mxu0 %v272
    %530 = vmatprep.subr.mxu0 0.0
    %531 = vmatpush1.msra.mxu0 %v271
    %532 = vmatprep.subr.mxu0 0.0
    %533 = vmatpush2.msra.mxu0 0.0
    %534 = vmatprep.subr.mxu0 0.0
    %535 = vmatpush2.msra.mxu0 0.0
    %536 = vmatprep.subr.mxu0 0.0
    %537 = vmatpush2.msra.mxu0 0.0
    %538 = vmatprep.subr.mxu0 0.0
    %539 = vmatpush2.msra.mxu0 0.0
    %540 = vmatprep.subr.mxu0 0.0
    %541 = vmatpush2.msra.mxu0 0.0
    %542 = vmatprep.subr.mxu0 0.0
    %543 = vmatpush2.msra.mxu0 0.0
    %544 = vmatprep.subr.mxu0 0.0
    %545 = vmatpush2.msra.mxu0 0.0
    %546 = vmatprep.subr.mxu0 0.0
    %547 = vmatpush2.msra.mxu0 0.0
    %548 = vmatprep.subr.mxu0 0.0
    %549 = vmatpush2.msra.mxu0 0.0
    %550 = vmatprep.subr.mxu0 0.0
    %551 = vmatpush2.msra.mxu0 0.0
    %552 = vmatprep.subr.mxu0 0.0
    %553 = vmatpush2.msra.mxu0 0.0
    %554 = vmatprep.subr.mxu0 0.0
    %555 = vmatpush2.msra.mxu0 0.0
    %556 = vmatprep.subr.mxu0 0.0
    %557 = vmatpush2.msra.mxu0 0.0
    %558 = vmatprep.subr.mxu0 0.0
    %559 = vmatpush2.msra.mxu0 0.0
    %560 = vmatprep.subr.mxu0 0.0
    %561 = vmatpush2.msra.mxu0 0.0
    %562 = vmatprep.subr.mxu0 0.0
    %563 = vmatpush2.msra.mxu0 0.0
    %564 = vmatprep.mubr.f32.mxu0 0.0
    %565 = vmatmul.mubr.f32.gmra.mxu0 %v498
    %v566 = vpop.f32.mrf.mxu0
    %v567 = vadd.f32 0.0, %v566
    %v568 = vpop.f32.mrf.mxu0
    %569 = vdwg.mxu0
    %v570 = vadd.f32 %v497, %v567
    %v571 = vxor.u32 %v570, 2147483648
    %v572 = vmul.f32 %v571, 1.442695
    %v573 = vpow.pop %v572
    %v574 = vadd.f32 %v573, 1.0
    %v575 = vrcp.pop %v574
    %v576 = vmul.f32 1.0, %v575
    %v577 = vtanh.pop %v570
    %v578 = vmul.f32 %v576, %v480
    %580 = vrot.lane.b32.xlu0 %v577, 64
    %v581 = vpop.permute.xlu0 %580
    %v583 = vmul.f32 %v576, %v581
    %585 = vrot.lane.b32.xlu0 %v583, 32
    %v586 = vpop.permute.xlu0 %585
    %v588 = vadd.f32 %v578, %v586
    %v589 = vtanh.pop %v588
    %591 = vrot.lane.b32.xlu0 %v589, 64
    %v592 = vpop.permute.xlu0 %591
    %v594 = vmul.f32 %v576, %v592
    %s595 = scalar_lea.vmem [#allocation5], 4
    %v596 = vld [vmem:[%s595] sm:$0x3]
    %598 = vrot.lane.b32.xlu0 %v594, 32
    %v599 = vpop.permute.xlu0 %598
    %v601 = vadd.f32 %v596, %v599
    %s602 = scalar_lea.vmem [#allocation11], 4
    %603 = vst.msk [vmem:[%s602] sm:$0x3] %vm386, %v601
    %s604 = scalar_lea.vmem [#allocation4], 6
    %v605 = vld [vmem:[%s604] sm:$0x3]
    %v606 = vsel %vm139, %v599, 0
    %608 = vmatprep.subr.mxu0 0.0
    %609 = vmatpush1.msra.mxu0 0.0
    %610 = vmatprep.subr.mxu0 0.0
    %611 = vmatpush1.msra.mxu0 0.0
    %612 = vmatprep.subr.mxu0 0.0
    %613 = vmatpush1.msra.mxu0 0.0
    %614 = vmatprep.subr.mxu0 0.0
    %615 = vmatpush1.msra.mxu0 0.0
    %616 = vmatprep.subr.mxu0 0.0
    %617 = vmatpush1.msra.mxu0 0.0
    %618 = vmatprep.subr.mxu0 0.0
    %619 = vmatpush1.msra.mxu0 0.0
    %620 = vmatprep.subr.mxu0 0.0
    %621 = vmatpush1.msra.mxu0 0.0
    %622 = vmatprep.subr.mxu0 0.0
    %623 = vmatpush1.msra.mxu0 0.0
    %624 = vmatprep.subr.mxu0 0.0
    %625 = vmatpush1.msra.mxu0 0.0
    %626 = vmatprep.subr.mxu0 0.0
    %627 = vmatpush1.msra.mxu0 0.0
    %628 = vmatprep.subr.mxu0 0.0
    %629 = vmatpush1.msra.mxu0 0.0
    %630 = vmatprep.subr.mxu0 0.0
    %631 = vmatpush1.msra.mxu0 0.0
    %632 = vmatprep.subr.mxu0 0.0
    %633 = vmatpush1.msra.mxu0 %v274
    %634 = vmatprep.subr.mxu0 0.0
    %635 = vmatpush1.msra.mxu0 %v273
    %636 = vmatprep.subr.mxu0 0.0
    %637 = vmatpush1.msra.mxu0 %v272
    %638 = vmatprep.subr.mxu0 0.0
    %639 = vmatpush1.msra.mxu0 %v271
    %640 = vmatprep.subr.mxu0 0.0
    %641 = vmatpush2.msra.mxu0 0.0
    %642 = vmatprep.subr.mxu0 0.0
    %643 = vmatpush2.msra.mxu0 0.0
    %644 = vmatprep.subr.mxu0 0.0
    %645 = vmatpush2.msra.mxu0 0.0
    %646 = vmatprep.subr.mxu0 0.0
    %647 = vmatpush2.msra.mxu0 0.0
    %648 = vmatprep.subr.mxu0 0.0
    %649 = vmatpush2.msra.mxu0 0.0
    %650 = vmatprep.subr.mxu0 0.0
    %651 = vmatpush2.msra.mxu0 0.0
    %652 = vmatprep.subr.mxu0 0.0
    %653 = vmatpush2.msra.mxu0 0.0
    %654 = vmatprep.subr.mxu0 0.0
    %655 = vmatpush2.msra.mxu0 0.0
    %656 = vmatprep.subr.mxu0 0.0
    %657 = vmatpush2.msra.mxu0 0.0
    %658 = vmatprep.subr.mxu0 0.0
    %659 = vmatpush2.msra.mxu0 0.0
    %660 = vmatprep.subr.mxu0 0.0
    %661 = vmatpush2.msra.mxu0 0.0
    %662 = vmatprep.subr.mxu0 0.0
    %663 = vmatpush2.msra.mxu0 0.0
    %664 = vmatprep.subr.mxu0 0.0
    %665 = vmatpush2.msra.mxu0 0.0
    %666 = vmatprep.subr.mxu0 0.0
    %667 = vmatpush2.msra.mxu0 0.0
    %668 = vmatprep.subr.mxu0 0.0
    %669 = vmatpush2.msra.mxu0 0.0
    %670 = vmatprep.subr.mxu0 0.0
    %671 = vmatpush2.msra.mxu0 0.0
    %672 = vmatprep.mubr.f32.mxu0 0.0
    %673 = vmatmul.mubr.f32.gmra.mxu0 %v606
    %v674 = vpop.f32.mrf.mxu0
    %v675 = vadd.f32 0.0, %v674
    %v676 = vpop.f32.mrf.mxu0
    %677 = vdwg.mxu0
    %v678 = vadd.f32 %v605, %v675
    %v679 = vxor.u32 %v678, 2147483648
    %v680 = vmul.f32 %v679, 1.442695
    %v681 = vpow.pop %v680
    %v682 = vadd.f32 %v681, 1.0
    %v683 = vrcp.pop %v682
    %v684 = vmul.f32 1.0, %v683
    %v685 = vtanh.pop %v678
    %v686 = vmul.f32 %v684, %v588
    %688 = vrot.lane.b32.xlu0 %v685, 64
    %v689 = vpop.permute.xlu0 %688
    %v691 = vmul.f32 %v684, %v689
    %693 = vrot.lane.b32.xlu0 %v691, 32
    %v694 = vpop.permute.xlu0 %693
    %v696 = vadd.f32 %v686, %v694
    %v697 = vtanh.pop %v696
    %699 = vrot.lane.b32.xlu0 %v697, 64
    %v700 = vpop.permute.xlu0 %699
    %v702 = vmul.f32 %v684, %v700
    %s703 = scalar_lea.vmem [#allocation5], 6
    %v704 = vld [vmem:[%s703] sm:$0x3]
    %706 = vrot.lane.b32.xlu0 %v702, 32
    %v707 = vpop.permute.xlu0 %706
    %v709 = vadd.f32 %v704, %v707
    %s710 = scalar_lea.vmem [#allocation11], 6
    %711 = vst.msk [vmem:[%s710] sm:$0x3] %vm386, %v709
    %s712 = scalar_lea.vmem [#allocation4], 8
    %v713 = vld [vmem:[%s712] sm:$0x3]
    %v714 = vsel %vm139, %v707, 0
    %716 = vmatprep.subr.mxu0 0.0
    %717 = vmatpush1.msra.mxu0 0.0
    %718 = vmatprep.subr.mxu0 0.0
    %719 = vmatpush1.msra.mxu0 0.0
    %720 = vmatprep.subr.mxu0 0.0
    %721 = vmatpush1.msra.mxu0 0.0
    %722 = vmatprep.subr.mxu0 0.0
    %723 = vmatpush1.msra.mxu0 0.0
    %724 = vmatprep.subr.mxu0 0.0
    %725 = vmatpush1.msra.mxu0 0.0
    %726 = vmatprep.subr.mxu0 0.0
    %727 = vmatpush1.msra.mxu0 0.0
    %728 = vmatprep.subr.mxu0 0.0
    %729 = vmatpush1.msra.mxu0 0.0
    %730 = vmatprep.subr.mxu0 0.0
    %731 = vmatpush1.msra.mxu0 0.0
    %732 = vmatprep.subr.mxu0 0.0
    %733 = vmatpush1.msra.mxu0 0.0
    %734 = vmatprep.subr.mxu0 0.0
    %735 = vmatpush1.msra.mxu0 0.0
    %736 = vmatprep.subr.mxu0 0.0
    %737 = vmatpush1.msra.mxu0 0.0
    %738 = vmatprep.subr.mxu0 0.0
    %739 = vmatpush1.msra.mxu0 0.0
    %740 = vmatprep.subr.mxu0 0.0
    %741 = vmatpush1.msra.mxu0 %v274
    %742 = vmatprep.subr.mxu0 0.0
    %743 = vmatpush1.msra.mxu0 %v273
    %744 = vmatprep.subr.mxu0 0.0
    %745 = vmatpush1.msra.mxu0 %v272
    %746 = vmatprep.subr.mxu0 0.0
    %747 = vmatpush1.msra.mxu0 %v271
    %748 = vmatprep.subr.mxu0 0.0
    %749 = vmatpush2.msra.mxu0 0.0
    %750 = vmatprep.subr.mxu0 0.0
    %751 = vmatpush2.msra.mxu0 0.0
    %752 = vmatprep.subr.mxu0 0.0
    %753 = vmatpush2.msra.mxu0 0.0
    %754 = vmatprep.subr.mxu0 0.0
    %755 = vmatpush2.msra.mxu0 0.0
    %756 = vmatprep.subr.mxu0 0.0
    %757 = vmatpush2.msra.mxu0 0.0
    %758 = vmatprep.subr.mxu0 0.0
    %759 = vmatpush2.msra.mxu0 0.0
    %760 = vmatprep.subr.mxu0 0.0
    %761 = vmatpush2.msra.mxu0 0.0
    %762 = vmatprep.subr.mxu0 0.0
    %763 = vmatpush2.msra.mxu0 0.0
    %764 = vmatprep.subr.mxu0 0.0
    %765 = vmatpush2.msra.mxu0 0.0
    %766 = vmatprep.subr.mxu0 0.0
    %767 = vmatpush2.msra.mxu0 0.0
    %768 = vmatprep.subr.mxu0 0.0
    %769 = vmatpush2.msra.mxu0 0.0
    %770 = vmatprep.subr.mxu0 0.0
    %771 = vmatpush2.msra.mxu0 0.0
    %772 = vmatprep.subr.mxu0 0.0
    %773 = vmatpush2.msra.mxu0 0.0
    %774 = vmatprep.subr.mxu0 0.0
    %775 = vmatpush2.msra.mxu0 0.0
    %776 = vmatprep.subr.mxu0 0.0
    %777 = vmatpush2.msra.mxu0 0.0
    %778 = vmatprep.subr.mxu0 0.0
    %779 = vmatpush2.msra.mxu0 0.0
    %780 = vmatprep.mubr.f32.mxu0 0.0
    %781 = vmatmul.mubr.f32.gmra.mxu0 %v714
    %v782 = vpop.f32.mrf.mxu0
    %v783 = vadd.f32 0.0, %v782
    %v784 = vpop.f32.mrf.mxu0
    %785 = vdwg.mxu0
    %v786 = vadd.f32 %v713, %v783
    %v787 = vxor.u32 %v786, 2147483648
    %v788 = vmul.f32 %v787, 1.442695
    %v789 = vpow.pop %v788
    %v790 = vadd.f32 %v789, 1.0
    %v791 = vrcp.pop %v790
    %v792 = vmul.f32 1.0, %v791
    %v793 = vtanh.pop %v786
    %v794 = vmul.f32 %v792, %v696
    %796 = vrot.lane.b32.xlu0 %v793, 64
    %v797 = vpop.permute.xlu0 %796
    %v799 = vmul.f32 %v792, %v797
    %801 = vrot.lane.b32.xlu0 %v799, 32
    %v802 = vpop.permute.xlu0 %801
    %v804 = vadd.f32 %v794, %v802
    %v805 = vtanh.pop %v804
    %807 = vrot.lane.b32.xlu0 %v805, 64
    %v808 = vpop.permute.xlu0 %807
    %v810 = vmul.f32 %v792, %v808
    %s811 = scalar_lea.vmem [#allocation5], 8
    %v812 = vld [vmem:[%s811] sm:$0x3]
    %814 = vrot.lane.b32.xlu0 %v810, 32
    %v815 = vpop.permute.xlu0 %814
    %v817 = vadd.f32 %v812, %v815
    %s818 = scalar_lea.vmem [#allocation11], 8
    %819 = vst.msk [vmem:[%s818] sm:$0x3] %vm386, %v817
    %s820 = scalar_lea.vmem [#allocation4], 10
    %v821 = vld [vmem:[%s820] sm:$0x3]
    %v822 = vsel %vm139, %v815, 0
    %824 = vmatprep.subr.mxu0 0.0
    %825 = vmatpush1.msra.mxu0 0.0
    %826 = vmatprep.subr.mxu0 0.0
    %827 = vmatpush1.msra.mxu0 0.0
    %828 = vmatprep.subr.mxu0 0.0
    %829 = vmatpush1.msra.mxu0 0.0
    %830 = vmatprep.subr.mxu0 0.0
    %831 = vmatpush1.msra.mxu0 0.0
    %832 = vmatprep.subr.mxu0 0.0
    %833 = vmatpush1.msra.mxu0 0.0
    %834 = vmatprep.subr.mxu0 0.0
    %835 = vmatpush1.msra.mxu0 0.0
    %836 = vmatprep.subr.mxu0 0.0
    %837 = vmatpush1.msra.mxu0 0.0
    %838 = vmatprep.subr.mxu0 0.0
    %839 = vmatpush1.msra.mxu0 0.0
    %840 = vmatprep.subr.mxu0 0.0
    %841 = vmatpush1.msra.mxu0 0.0
    %842 = vmatprep.subr.mxu0 0.0
    %843 = vmatpush1.msra.mxu0 0.0
    %844 = vmatprep.subr.mxu0 0.0
    %845 = vmatpush1.msra.mxu0 0.0
    %846 = vmatprep.subr.mxu0 0.0
    %847 = vmatpush1.msra.mxu0 0.0
    %848 = vmatprep.subr.mxu0 0.0
    %849 = vmatpush1.msra.mxu0 %v274
    %850 = vmatprep.subr.mxu0 0.0
    %851 = vmatpush1.msra.mxu0 %v273
    %852 = vmatprep.subr.mxu0 0.0
    %853 = vmatpush1.msra.mxu0 %v272
    %854 = vmatprep.subr.mxu0 0.0
    %855 = vmatpush1.msra.mxu0 %v271
    %856 = vmatprep.subr.mxu0 0.0
    %857 = vmatpush2.msra.mxu0 0.0
    %858 = vmatprep.subr.mxu0 0.0
    %859 = vmatpush2.msra.mxu0 0.0
    %860 = vmatprep.subr.mxu0 0.0
    %861 = vmatpush2.msra.mxu0 0.0
    %862 = vmatprep.subr.mxu0 0.0
    %863 = vmatpush2.msra.mxu0 0.0
    %864 = vmatprep.subr.mxu0 0.0
    %865 = vmatpush2.msra.mxu0 0.0
    %866 = vmatprep.subr.mxu0 0.0
    %867 = vmatpush2.msra.mxu0 0.0
    %868 = vmatprep.subr.mxu0 0.0
    %869 = vmatpush2.msra.mxu0 0.0
    %870 = vmatprep.subr.mxu0 0.0
    %871 = vmatpush2.msra.mxu0 0.0
    %872 = vmatprep.subr.mxu0 0.0
    %873 = vmatpush2.msra.mxu0 0.0
    %874 = vmatprep.subr.mxu0 0.0
    %875 = vmatpush2.msra.mxu0 0.0
    %876 = vmatprep.subr.mxu0 0.0
    %877 = vmatpush2.msra.mxu0 0.0
    %878 = vmatprep.subr.mxu0 0.0
    %879 = vmatpush2.msra.mxu0 0.0
    %880 = vmatprep.subr.mxu0 0.0
    %881 = vmatpush2.msra.mxu0 0.0
    %882 = vmatprep.subr.mxu0 0.0
    %883 = vmatpush2.msra.mxu0 0.0
    %884 = vmatprep.subr.mxu0 0.0
    %885 = vmatpush2.msra.mxu0 0.0
    %886 = vmatprep.subr.mxu0 0.0
    %887 = vmatpush2.msra.mxu0 0.0
    %888 = vmatprep.mubr.f32.mxu0 0.0
    %889 = vmatmul.mubr.f32.gmra.mxu0 %v822
    %v890 = vpop.f32.mrf.mxu0
    %v891 = vadd.f32 0.0, %v890
    %v892 = vpop.f32.mrf.mxu0
    %893 = vdwg.mxu0
    %v894 = vadd.f32 %v821, %v891
    %v895 = vxor.u32 %v894, 2147483648
    %v896 = vmul.f32 %v895, 1.442695
    %v897 = vpow.pop %v896
    %v898 = vadd.f32 %v897, 1.0
    %v899 = vrcp.pop %v898
    %v900 = vmul.f32 1.0, %v899
    %v901 = vtanh.pop %v894
    %v902 = vmul.f32 %v900, %v804
    %904 = vrot.lane.b32.xlu0 %v901, 64
    %v905 = vpop.permute.xlu0 %904
    %v907 = vmul.f32 %v900, %v905
    %909 = vrot.lane.b32.xlu0 %v907, 32
    %v910 = vpop.permute.xlu0 %909
    %v912 = vadd.f32 %v902, %v910
    %v913 = vtanh.pop %v912
    %915 = vrot.lane.b32.xlu0 %v913, 64
    %v916 = vpop.permute.xlu0 %915
    %v918 = vmul.f32 %v900, %v916
    %s919 = scalar_lea.vmem [#allocation5], 10
    %v920 = vld [vmem:[%s919] sm:$0x3]
    %922 = vrot.lane.b32.xlu0 %v918, 32
    %v923 = vpop.permute.xlu0 %922
    %v925 = vadd.f32 %v920, %v923
    %s926 = scalar_lea.vmem [#allocation11], 10
    %927 = vst.msk [vmem:[%s926] sm:$0x3] %vm386, %v925
    %s928 = scalar_lea.vmem [#allocation4], 12
    %v929 = vld [vmem:[%s928] sm:$0x3]
    %v930 = vsel %vm139, %v923, 0
    %932 = vmatprep.subr.mxu0 0.0
    %933 = vmatpush1.msra.mxu0 0.0
    %934 = vmatprep.subr.mxu0 0.0
    %935 = vmatpush1.msra.mxu0 0.0
    %936 = vmatprep.subr.mxu0 0.0
    %937 = vmatpush1.msra.mxu0 0.0
    %938 = vmatprep.subr.mxu0 0.0
    %939 = vmatpush1.msra.mxu0 0.0
    %940 = vmatprep.subr.mxu0 0.0
    %941 = vmatpush1.msra.mxu0 0.0
    %942 = vmatprep.subr.mxu0 0.0
    %943 = vmatpush1.msra.mxu0 0.0
    %944 = vmatprep.subr.mxu0 0.0
    %945 = vmatpush1.msra.mxu0 0.0
    %946 = vmatprep.subr.mxu0 0.0
    %947 = vmatpush1.msra.mxu0 0.0
    %948 = vmatprep.subr.mxu0 0.0
    %949 = vmatpush1.msra.mxu0 0.0
    %950 = vmatprep.subr.mxu0 0.0
    %951 = vmatpush1.msra.mxu0 0.0
    %952 = vmatprep.subr.mxu0 0.0
    %953 = vmatpush1.msra.mxu0 0.0
    %954 = vmatprep.subr.mxu0 0.0
    %955 = vmatpush1.msra.mxu0 0.0
    %956 = vmatprep.subr.mxu0 0.0
    %957 = vmatpush1.msra.mxu0 %v274
    %958 = vmatprep.subr.mxu0 0.0
    %959 = vmatpush1.msra.mxu0 %v273
    %960 = vmatprep.subr.mxu0 0.0
    %961 = vmatpush1.msra.mxu0 %v272
    %962 = vmatprep.subr.mxu0 0.0
    %963 = vmatpush1.msra.mxu0 %v271
    %964 = vmatprep.subr.mxu0 0.0
    %965 = vmatpush2.msra.mxu0 0.0
    %966 = vmatprep.subr.mxu0 0.0
    %967 = vmatpush2.msra.mxu0 0.0
    %968 = vmatprep.subr.mxu0 0.0
    %969 = vmatpush2.msra.mxu0 0.0
    %970 = vmatprep.subr.mxu0 0.0
    %971 = vmatpush2.msra.mxu0 0.0
    %972 = vmatprep.subr.mxu0 0.0
    %973 = vmatpush2.msra.mxu0 0.0
    %974 = vmatprep.subr.mxu0 0.0
    %975 = vmatpush2.msra.mxu0 0.0
    %976 = vmatprep.subr.mxu0 0.0
    %977 = vmatpush2.msra.mxu0 0.0
    %978 = vmatprep.subr.mxu0 0.0
    %979 = vmatpush2.msra.mxu0 0.0
    %980 = vmatprep.subr.mxu0 0.0
    %981 = vmatpush2.msra.mxu0 0.0
    %982 = vmatprep.subr.mxu0 0.0
    %983 = vmatpush2.msra.mxu0 0.0
    %984 = vmatprep.subr.mxu0 0.0
    %985 = vmatpush2.msra.mxu0 0.0
    %986 = vmatprep.subr.mxu0 0.0
    %987 = vmatpush2.msra.mxu0 0.0
    %988 = vmatprep.subr.mxu0 0.0
    %989 = vmatpush2.msra.mxu0 0.0
    %990 = vmatprep.subr.mxu0 0.0
    %991 = vmatpush2.msra.mxu0 0.0
    %992 = vmatprep.subr.mxu0 0.0
    %993 = vmatpush2.msra.mxu0 0.0
    %994 = vmatprep.subr.mxu0 0.0
    %995 = vmatpush2.msra.mxu0 0.0
    %996 = vmatprep.mubr.f32.mxu0 0.0
    %997 = vmatmul.mubr.f32.gmra.mxu0 %v930
    %v998 = vpop.f32.mrf.mxu0
    %v999 = vadd.f32 0.0, %v998
    %v1000 = vpop.f32.mrf.mxu0
    %1001 = vdwg.mxu0
    %v1002 = vadd.f32 %v929, %v999
    %v1003 = vxor.u32 %v1002, 2147483648
    %v1004 = vmul.f32 %v1003, 1.442695
    %v1005 = vpow.pop %v1004
    %v1006 = vadd.f32 %v1005, 1.0
    %v1007 = vrcp.pop %v1006
    %v1008 = vmul.f32 1.0, %v1007
    %v1009 = vtanh.pop %v1002
    %v1010 = vmul.f32 %v1008, %v912
    %1012 = vrot.lane.b32.xlu0 %v1009, 64
    %v1013 = vpop.permute.xlu0 %1012
    %v1015 = vmul.f32 %v1008, %v1013
    %1017 = vrot.lane.b32.xlu0 %v1015, 32
    %v1018 = vpop.permute.xlu0 %1017
    %v1020 = vadd.f32 %v1010, %v1018
    %v1021 = vtanh.pop %v1020
    %1023 = vrot.lane.b32.xlu0 %v1021, 64
    %v1024 = vpop.permute.xlu0 %1023
    %v1026 = vmul.f32 %v1008, %v1024
    %s1027 = scalar_lea.vmem [#allocation5], 12
    %v1028 = vld [vmem:[%s1027] sm:$0x3]
    %1030 = vrot.lane.b32.xlu0 %v1026, 32
    %v1031 = vpop.permute.xlu0 %1030
    %v1033 = vadd.f32 %v1028, %v1031
    %s1034 = scalar_lea.vmem [#allocation11], 12
    %1035 = vst.msk [vmem:[%s1034] sm:$0x3] %vm386, %v1033
    %s1036 = scalar_lea.vmem [#allocation4], 14
    %v1037 = vld [vmem:[%s1036] sm:$0x3]
    %v1038 = vsel %vm139, %v1031, 0
    %1040 = vmatprep.subr.mxu0 0.0
    %1041 = vmatpush1.msra.mxu0 0.0
    %1042 = vmatprep.subr.mxu0 0.0
    %1043 = vmatpush1.msra.mxu0 0.0
    %1044 = vmatprep.subr.mxu0 0.0
    %1045 = vmatpush1.msra.mxu0 0.0
    %1046 = vmatprep.subr.mxu0 0.0
    %1047 = vmatpush1.msra.mxu0 0.0
    %1048 = vmatprep.subr.mxu0 0.0
    %1049 = vmatpush1.msra.mxu0 0.0
    %1050 = vmatprep.subr.mxu0 0.0
    %1051 = vmatpush1.msra.mxu0 0.0
    %1052 = vmatprep.subr.mxu0 0.0
    %1053 = vmatpush1.msra.mxu0 0.0
    %1054 = vmatprep.subr.mxu0 0.0
    %1055 = vmatpush1.msra.mxu0 0.0
    %1056 = vmatprep.subr.mxu0 0.0
    %1057 = vmatpush1.msra.mxu0 0.0
    %1058 = vmatprep.subr.mxu0 0.0
    %1059 = vmatpush1.msra.mxu0 0.0
    %1060 = vmatprep.subr.mxu0 0.0
    %1061 = vmatpush1.msra.mxu0 0.0
    %1062 = vmatprep.subr.mxu0 0.0
    %1063 = vmatpush1.msra.mxu0 0.0
    %1064 = vmatprep.subr.mxu0 0.0
    %1065 = vmatpush1.msra.mxu0 %v274
    %1066 = vmatprep.subr.mxu0 0.0
    %1067 = vmatpush1.msra.mxu0 %v273
    %1068 = vmatprep.subr.mxu0 0.0
    %1069 = vmatpush1.msra.mxu0 %v272
    %1070 = vmatprep.subr.mxu0 0.0
    %1071 = vmatpush1.msra.mxu0 %v271
    %1072 = vmatprep.subr.mxu0 0.0
    %1073 = vmatpush2.msra.mxu0 0.0
    %1074 = vmatprep.subr.mxu0 0.0
    %1075 = vmatpush2.msra.mxu0 0.0
    %1076 = vmatprep.subr.mxu0 0.0
    %1077 = vmatpush2.msra.mxu0 0.0
    %1078 = vmatprep.subr.mxu0 0.0
    %1079 = vmatpush2.msra.mxu0 0.0
    %1080 = vmatprep.subr.mxu0 0.0
    %1081 = vmatpush2.msra.mxu0 0.0
    %1082 = vmatprep.subr.mxu0 0.0
    %1083 = vmatpush2.msra.mxu0 0.0
    %1084 = vmatprep.subr.mxu0 0.0
    %1085 = vmatpush2.msra.mxu0 0.0
    %1086 = vmatprep.subr.mxu0 0.0
    %1087 = vmatpush2.msra.mxu0 0.0
    %1088 = vmatprep.subr.mxu0 0.0
    %1089 = vmatpush2.msra.mxu0 0.0
    %1090 = vmatprep.subr.mxu0 0.0
    %1091 = vmatpush2.msra.mxu0 0.0
    %1092 = vmatprep.subr.mxu0 0.0
    %1093 = vmatpush2.msra.mxu0 0.0
    %1094 = vmatprep.subr.mxu0 0.0
    %1095 = vmatpush2.msra.mxu0 0.0
    %1096 = vmatprep.subr.mxu0 0.0
    %1097 = vmatpush2.msra.mxu0 0.0
    %1098 = vmatprep.subr.mxu0 0.0
    %1099 = vmatpush2.msra.mxu0 0.0
    %1100 = vmatprep.subr.mxu0 0.0
    %1101 = vmatpush2.msra.mxu0 0.0
    %1102 = vmatprep.subr.mxu0 0.0
    %1103 = vmatpush2.msra.mxu0 0.0
    %1104 = vmatprep.mubr.f32.mxu0 0.0
    %1105 = vmatmul.mubr.f32.gmra.mxu0 %v1038
    %v1106 = vpop.f32.mrf.mxu0
    %v1107 = vadd.f32 0.0, %v1106
    %v1108 = vpop.f32.mrf.mxu0
    %1109 = vdwg.mxu0
    %v1110 = vadd.f32 %v1037, %v1107
    %v1111 = vxor.u32 %v1110, 2147483648
    %v1112 = vmul.f32 %v1111, 1.442695
    %v1113 = vpow.pop %v1112
    %v1114 = vadd.f32 %v1113, 1.0
    %v1115 = vrcp.pop %v1114
    %v1116 = vmul.f32 1.0, %v1115
    %v1117 = vtanh.pop %v1110
    %v1118 = vmul.f32 %v1116, %v1020
    %1120 = vrot.lane.b32.xlu0 %v1117, 64
    %v1121 = vpop.permute.xlu0 %1120
    %v1123 = vmul.f32 %v1116, %v1121
    %1125 = vrot.lane.b32.xlu0 %v1123, 32
    %v1126 = vpop.permute.xlu0 %1125
    %v1128 = vadd.f32 %v1118, %v1126
    %v1129 = vtanh.pop %v1128
    %1131 = vrot.lane.b32.xlu0 %v1129, 64
    %v1132 = vpop.permute.xlu0 %1131
    %v1134 = vmul.f32 %v1116, %v1132
    %s1135 = scalar_lea.vmem [#allocation5], 14
    %v1136 = vld [vmem:[%s1135] sm:$0x3]
    %1138 = vrot.lane.b32.xlu0 %v1134, 32
    %v1139 = vpop.permute.xlu0 %1138
    %v1141 = vadd.f32 %v1136, %v1139
    %s1142 = scalar_lea.vmem [#allocation11], 14
    %1143 = vst.msk [vmem:[%s1142] sm:$0x3] %vm386, %v1141
    %1144 = vst.msk [vmem:[#allocation2] sm:$0x3] %vm386, %v1139
    %1146 = vrot.lane.b32.xlu0 %v1128, 96
    %v1147 = vpop.permute.xlu0 %1146
    %1149 = vst.msk [vmem:[#allocation3] sm:$0x3] %vm386, %v1147
    // Predicated region
    $region42: #{tpu_custom_call.1} parent=1 // pred_check
      %p1150 = pneg %p69
    $region43: #{tpu_custom_call.1} parent=1 // pred_check_branch
      %1152 = sbr.rel (%p1150) target = $region45
    $region44: #{tpu_custom_call.1} parent=1 // pred_region
      %1153 = vst.msk [vmem:[#allocation12] sm:$0x3] %vm386, %v1139
      %1154 = vst.msk [vmem:[#allocation14] sm:$0x3] %vm386, %v1147
    $region45: #{tpu_custom_call.1} parent=1 // pred_fallthru
      _
    // Predicated region
    $region46: #{tpu_custom_call.1} parent=1 // pred_check
      _
    $region47: #{tpu_custom_call.1} parent=1 // pred_check_branch
      %1156 = sbr.rel (0) target = $region49
    $region48: #{tpu_custom_call.1} parent=1 // pred_region
      %s1158 = ssub.s32 256, 256
      %1159 = vsyncadd [#allocation7], %s1158
      %s1160 = sshll.u32 [#allocation11], 4
      %s1161 = int_to_ptr.vmem [resolvable:$true] %s1160
      %1166 = dma.vmem_to_hbm [thread:$0]  %s1161, 256, %s6, [#allocation7], 32, 32, 2
    $region49: #{tpu_custom_call.1} parent=1 // pred_fallthru
      _
    // Predicated region
    $region50: #{tpu_custom_call.1} parent=1 // pred_check
      _
    $region51: #{tpu_custom_call.1} parent=1 // pred_check_branch
      %1168 = sbr.rel (0) target = $region53
    $region52: #{tpu_custom_call.1} parent=1 // pred_region
      %s1170 = ssub.s32 32, 32
      %1171 = vsyncadd [#allocation13], %s1170
      %s1173 = sshll.u32 [#allocation12], 4
      %s1174 = int_to_ptr.vmem [resolvable:$true] %s1173
      %1176 = dma.vmem_to_hbm [thread:$0]  %s1174, 32, %s7, [#allocation13]
    $region53: #{tpu_custom_call.1} parent=1 // pred_fallthru
      _
    // Predicated region
    $region54: #{tpu_custom_call.1} parent=1 // pred_check
      _
    $region55: #{tpu_custom_call.1} parent=1 // pred_check_branch
      %1178 = sbr.rel (0) target = $region57
    $region56: #{tpu_custom_call.1} parent=1 // pred_region
      %s1180 = ssub.s32 32, 32
      %1181 = vsyncadd [#allocation13], %s1180
      %s1183 = sshll.u32 [#allocation14], 4
      %s1184 = int_to_ptr.vmem [resolvable:$true] %s1183
      %1186 = dma.vmem_to_hbm [thread:$0]  %s1184, 32, %s8, [#allocation13]
    $region57: #{tpu_custom_call.1} parent=1 // pred_fallthru
      _
    // Predicated region
    $region58: #{tpu_custom_call.1} parent=1 // pred_check
      _
    $region59: #{tpu_custom_call.1} parent=1 // pred_check_branch
      %1188 = sbr.rel (0) target = $region61
    $region60: #{tpu_custom_call.1} parent=1 // pred_region
      %1189 = dma.done [#allocation7], 256
    $region61: #{tpu_custom_call.1} parent=1 // pred_fallthru
      _
    // Predicated region
    $region62: #{tpu_custom_call.1} parent=1 // pred_check
      _
    $region63: #{tpu_custom_call.1} parent=1 // pred_check_branch
      %1191 = sbr.rel (0) target = $region65
    $region64: #{tpu_custom_call.1} parent=1 // pred_region
      %1192 = dma.done [#allocation13], 32
    $region65: #{tpu_custom_call.1} parent=1 // pred_fallthru
      _
    // Predicated region
    $region66: #{tpu_custom_call.1} parent=1 // pred_check
      _
    $region67: #{tpu_custom_call.1} parent=1 // pred_check_branch
      %1194 = sbr.rel (0) target = $region69
    $region68: #{tpu_custom_call.1} parent=1 // pred_region
      %1195 = dma.done [#allocation13], 32
    $region69: #{tpu_custom_call.1} parent=1 // pred_fallthru
      _
    %1196 = vsyncpa [#allocation6], 1
    %1197 = vsyncpa [#allocation9], 1
    %1198 = vsyncpa [#allocation7], 1
    %1199 = vsyncpa [#allocation13], 1

</llo_original>
